<compile_context>
chip_gen: v6e
topology: v6e:2x2x1
jax: 0.10.0
libtpu: 0.0.40
codegen_flags: <defaults>
</compile_context>

<pallas_src>
import jax
import jax.numpy as jnp
import numpy as np
from jax.experimental import pallas as pl
from jax.experimental.pallas import tpu as pltpu


# ----------------------------- Pallas kernel ------------------------------- #

def _encoder_fused_kernel(p_ref, w1_ref, b1_ref, w2_ref, b2_ref, w3t_ref, b3_ref,
                          o_ref, a1pad_ref, a1col_ref):
    """Fused ENCODER1 forward for one batch block.

    p_ref     : (Mb, 9*Cin)      layer-1 im2col rows (Mb = Bb*Ho*Wo)
    w1_ref    : (9*Cin, C1)      3x3/s2 conv weights, tap-major
    w2_ref    : (9*C1,  C2)      3x3/s1 conv weights, tap-major
    w3t_ref   : (C3, C2)         1x1 conv weights (row = out channel)
    b*_ref    : biases ((1,C1), (1,C2), (C3,1))
    o_ref     : (C3, Mb)         lane-dense output block
    a1pad_ref : VMEM (Bb, Ho+2, Wo+2, C1)   zero-padded layer-1 activation
    a1col_ref : VMEM (Mb, 9*C1)             layer-2 im2col staging buffer
    """
    bb, hp, wp, c1 = a1pad_ref.shape
    ho, wo = hp - 2, wp - 2
    mb = bb * ho * wo

    # ---- layer 1: single K = 9*Cin GEMM + bias + tanh -------------------------
    a1 = jnp.tanh(jnp.dot(p_ref[...], w1_ref[...],
                          preferred_element_type=jnp.float32) + b1_ref[...])   # (Mb, C1)

    # Write the padded activation: only the 1-px border strips are zeroed (cheap,
    # and correct however the parallel grid axis is split across TensorCores);
    # the interior is fully overwritten every step.
    zrow = jnp.zeros((bb, 1, wp, c1), jnp.float32)
    zcol = jnp.zeros((bb, hp, 1, c1), jnp.float32)
    a1pad_ref[:, 0:1, :, :] = zrow
    a1pad_ref[:, ho + 1:ho + 2, :, :] = zrow
    a1pad_ref[:, :, 0:1, :] = zcol
    a1pad_ref[:, :, wo + 1:wo + 2, :] = zcol
    a1pad_ref[:, 1:ho + 1, 1:wo + 1, :] = a1.reshape(bb, ho, wo, c1)

    # ---- layer 2: tap-concatenated im2col (VMEM staged) -> one K = 9*C1 GEMM ---
    for di in range(3):
        for dj in range(3):
            t = di * 3 + dj
            a1col_ref[:, t * c1:(t + 1) * c1] = (
                a1pad_ref[:, di:di + ho, dj:dj + wo, :].reshape(mb, c1))
    a2 = jnp.tanh(jnp.dot(a1col_ref[...], w2_ref[...],
                          preferred_element_type=jnp.float32) + b2_ref[...])   # (Mb, C2)

    # ---- layer 3: 1x1 conv, computed as (C3, Mb) so the store is lane-dense ----
    out_t = jax.lax.dot_general(
        w3t_ref[...], a2, dimension_numbers=(((1,), (1,)), ((), ())),
        preferred_element_type=jnp.float32) + b3_ref[...]                      # (C3, Mb)
    o_ref[...] = out_t.astype(o_ref.dtype)


# ------------------------------ JAX wrapper --------------------------------- #

def _pack_conv3x3_weight(w_oihw):
    """(O, I, 3, 3) -> (9*I, O), tap-major (K index = (di*3+dj)*I + c)."""
    cout, cin, kh, kw = w_oihw.shape
    return jnp.transpose(w_oihw, (2, 3, 1, 0)).reshape(kh * kw * cin, cout)


def _pick_batch_block(batch, rows_per_image, max_rows=512):
    """Largest divisor of `batch` whose folded GEMM M stays <= max_rows and keeps
    the input/output blocks (8,128)-aligned (trivially true for the full batch)."""
    best = 1
    for cand in range(1, batch + 1):
        if batch % cand != 0:
            continue
        rows = cand * rows_per_image
        aligned = (cand == batch) or (rows % 128 == 0)
        if rows <= max_rows and aligned:
            best = cand
    return best


def encoder1_forward(params, x_nchw):
    """ENCODER1.forward: x.float() -> conv3x3/s2 -> tanh -> conv3x3 -> tanh -> conv1x1."""
    x = x_nchw.astype(jnp.float32)
    B, cin, H, W = x.shape
    assert H % 2 == 0 and W % 2 == 0
    ho, wo = H // 2, W // 2

    # ---- layer-1 im2col in the wrapper (tap-major, channels innermost) --------
    x_nhwc = jnp.transpose(x, (0, 2, 3, 1))
    xpad = jnp.pad(x_nhwc, ((0, 0), (1, 1), (1, 1), (0, 0)))
    taps = [xpad[:, di:di + 2 * ho:2, dj:dj + 2 * wo:2, :]
            for di in range(3) for dj in range(3)]
    patches = jnp.concatenate(taps, axis=-1).reshape(B * ho * wo, 9 * cin)

    # ---- weight / bias packing -------------------------------------------------
    w1 = _pack_conv3x3_weight(params["w1"]).astype(jnp.float32)   # (9*Cin, C1)
    w2 = _pack_conv3x3_weight(params["w2"]).astype(jnp.float32)   # (9*C1,  C2)
    c1, c2 = w1.shape[1], w2.shape[1]
    w3t = params["w3"][:, :, 0, 0].astype(jnp.float32)            # (C3, C2)
    c3 = w3t.shape[0]
    b1 = params["b1"].reshape(1, c1).astype(jnp.float32)
    b2 = params["b2"].reshape(1, c2).astype(jnp.float32)
    b3 = params["b3"].reshape(c3, 1).astype(jnp.float32)

    bb = _pick_batch_block(B, ho * wo)
    mb = bb * ho * wo
    grid = (B // bb,)

    out_flat = pl.pallas_call(
        _encoder_fused_kernel,
        out_shape=jax.ShapeDtypeStruct((c3, B * ho * wo), jnp.float32),
        grid=grid,
        in_specs=[
            pl.BlockSpec((mb, 9 * cin), lambda g: (g, 0)),
            pl.BlockSpec((9 * cin, c1), lambda g: (0, 0)),
            pl.BlockSpec((1, c1), lambda g: (0, 0)),
            pl.BlockSpec((9 * c1, c2), lambda g: (0, 0)),
            pl.BlockSpec((1, c2), lambda g: (0, 0)),
            pl.BlockSpec((c3, c2), lambda g: (0, 0)),
            pl.BlockSpec((c3, 1), lambda g: (0, 0)),
        ],
        out_specs=pl.BlockSpec((c3, mb), lambda g: (0, g)),
        scratch_shapes=[
            pltpu.VMEM((bb, ho + 2, wo + 2, c1), jnp.float32),   # padded a1
            pltpu.VMEM((mb, 9 * c1), jnp.float32),               # layer-2 im2col
        ],
        compiler_params=pltpu.CompilerParams(
            dimension_semantics=("parallel",)),
    )(patches, w1, b1, w2, b2, w3t, b3)

    # (C3, B*Ho*Wo) -> NCHW
    out = out_flat.reshape(c3, B, ho, wo)
    return jnp.transpose(out, (1, 0, 2, 3))


# ------------------------------ params / reference -------------------------- #

def init_encoder_params(key, in_feat_dim, codebook_dim, hidden_dim):
    """Deterministic PyTorch-style (OIHW weights, per-Cout bias) init."""
    h2 = hidden_dim // 2
    keys = jax.random.split(key, 6)

    def conv_init(kw_key, kb_key, cout, cin, kh, kw):
        fan_in = cin * kh * kw
        bound = 1.0 / np.sqrt(fan_in)
        w = jax.random.uniform(kw_key, (cout, cin, kh, kw), jnp.float32,
                               -bound, bound)
        b = jax.random.uniform(kb_key, (cout,), jnp.float32, -bound, bound)
        return w, b

    w1, b1 = conv_init(keys[0], keys[1], h2, in_feat_dim, 3, 3)
    w2, b2 = conv_init(keys[2], keys[3], hidden_dim, h2, 3, 3)
    w3, b3 = conv_init(keys[4], keys[5], codebook_dim, hidden_dim, 1, 1)
    return dict(w1=w1, b1=b1, w2=w2, b2=b2, w3=w3, b3=b3)


def reference_forward(params, x_nchw):
    """Pure-JAX reference (lax conv, full f32 precision) for correctness checking."""
    x = x_nchw.astype(jnp.float32)

    def conv(x, w, b, stride, pad):
        y = jax.lax.conv_general_dilated(
            x, w, window_strides=(stride, stride),
            padding=((pad, pad), (pad, pad)),
            dimension_numbers=("NCHW", "OIHW", "NCHW"),
            precision=jax.lax.Precision.HIGHEST)
        return y + b.reshape(1, -1, 1, 1)

    h = jnp.tanh(conv(x, params["w1"], params["b1"], 2, 1))
    h = jnp.tanh(conv(h, params["w2"], params["b2"], 1, 1))
    return conv(h, params["w3"], params["b3"], 1, 0)


# --------------------------------- main ------------------------------------- #

if __name__ == "__main__":
    key = jax.random.PRNGKey(0)
    kp, kx = jax.random.split(key)

    # Small shapes consistent with the module's forward.
    in_feat_dim, codebook_dim, hidden_dim = 4, 32, 32
    B, H, W = 2, 16, 16

    params = init_encoder_params(kp, in_feat_dim, codebook_dim, hidden_dim)
    x = jax.random.normal(kx, (B, in_feat_dim, H, W), jnp.float32)  # NCHW

    out = jax.jit(encoder1_forward)(params, x)
    out = jax.block_until_ready(out)
    assert out.shape == (B, codebook_dim, H // 2, W // 2), out.shape

    ref = jax.block_until_ready(reference_forward(params, x))
    np.testing.assert_allclose(np.asarray(out), np.asarray(ref),
                               rtol=1e-4, atol=1e-5)
    print("KERNEL_OK")
</pallas_src>

<mosaic_0001>
module attributes {stable_mosaic.version = 11 : i64} {
  func.func @_encoder_fused_kernel(%arg0: i32, %arg1: memref<128x36xf32, #tpu.memory_space<vmem>>, %arg2: memref<36x16xf32, #tpu.memory_space<vmem>>, %arg3: memref<1x16xf32, #tpu.memory_space<vmem>>, %arg4: memref<144x32xf32, #tpu.memory_space<vmem>>, %arg5: memref<1x32xf32, #tpu.memory_space<vmem>>, %arg6: memref<32x32xf32, #tpu.memory_space<vmem>>, %arg7: memref<32x1xf32, #tpu.memory_space<vmem>>, %arg8: memref<32x128xf32, #tpu.memory_space<vmem>>, %arg9: memref<2x10x10x16xf32, #tpu.memory_space<vmem>>, %arg10: memref<128x144xf32, #tpu.memory_space<vmem>>) attributes {dimension_semantics = [#tpu.dimension_semantics<parallel>], iteration_bounds = array<i64: 1>, scalar_prefetch = 0 : i64, scratch_operands = 2 : i64, tpu.core_type = #tpu.core_type<tc>, window_params = [{transform_indices = @transform_0, window_bounds = array<i64: 128, 36>}, {pipeline_mode = #tpu.pipeline_mode<synchronous>, transform_indices = @transform_1, window_bounds = array<i64: 36, 16>}, {pipeline_mode = #tpu.pipeline_mode<synchronous>, transform_indices = @transform_2, window_bounds = array<i64: 1, 16>}, {pipeline_mode = #tpu.pipeline_mode<synchronous>, transform_indices = @transform_3, window_bounds = array<i64: 144, 32>}, {pipeline_mode = #tpu.pipeline_mode<synchronous>, transform_indices = @transform_4, window_bounds = array<i64: 1, 32>}, {pipeline_mode = #tpu.pipeline_mode<synchronous>, transform_indices = @transform_5, window_bounds = array<i64: 32, 32>}, {pipeline_mode = #tpu.pipeline_mode<synchronous>, transform_indices = @transform_6, window_bounds = array<i64: 32, 1>}, {transform_indices = @transform_7, window_bounds = array<i64: 32, 128>}]} {
    %c0 = arith.constant 0 : index
    %c0_0 = arith.constant 0 : index
    %0 = vector.load %arg1[%c0, %c0_0] : memref<128x36xf32, #tpu.memory_space<vmem>>, vector<128x36xf32>
    %c0_1 = arith.constant 0 : index
    %c0_2 = arith.constant 0 : index
    %1 = vector.load %arg2[%c0_1, %c0_2] : memref<36x16xf32, #tpu.memory_space<vmem>>, vector<36x16xf32>
    %cst = arith.constant dense<0.000000e+00> : vector<128x16xf32>
    %2 = tpu.matmul %0, %1, %cst {dimension_numbers = #tpu.dot_dimension_numbers<[1], [0], [0], [1], [0, 0, 1, 1], [], []>} : vector<128x36xf32>, vector<36x16xf32>, vector<128x16xf32> -> vector<128x16xf32>
    %c0_3 = arith.constant 0 : index
    %c0_4 = arith.constant 0 : index
    %3 = vector.load %arg3[%c0_3, %c0_4] : memref<1x16xf32, #tpu.memory_space<vmem>>, vector<1x16xf32>
    %4 = vector.broadcast %3 : vector<1x16xf32> to vector<128x16xf32>
    %5 = arith.addf %2, %4 : vector<128x16xf32>
    %6 = math.tanh %5 : vector<128x16xf32>
    %cst_5 = arith.constant 0.000000e+00 : f32
    %7 = vector.broadcast %cst_5 : f32 to vector<2x1x10x16xf32>
    %cst_6 = arith.constant 0.000000e+00 : f32
    %8 = vector.broadcast %cst_6 : f32 to vector<2x10x1x16xf32>
    %c0_7 = arith.constant 0 : index
    %c0_8 = arith.constant 0 : index
    %c0_9 = arith.constant 0 : index
    %c0_10 = arith.constant 0 : index
    %9 = vector.load %arg9[%c0_7, %c0_8, %c0_9, %c0_10] : memref<2x10x10x16xf32, #tpu.memory_space<vmem>>, vector<2x1x10x16xf32>
    tpu.vector_store %arg9[%c0_7, %c0_8, %c0_9, %c0_10], %7 {strides = array<i32>} : memref<2x10x10x16xf32, #tpu.memory_space<vmem>>, vector<2x1x10x16xf32>,
    %c0_11 = arith.constant 0 : index
    %c9 = arith.constant 9 : index
    %c0_12 = arith.constant 0 : index
    %c0_13 = arith.constant 0 : index
    %10 = vector.load %arg9[%c0_11, %c9, %c0_12, %c0_13] : memref<2x10x10x16xf32, #tpu.memory_space<vmem>>, vector<2x1x10x16xf32>
    tpu.vector_store %arg9[%c0_11, %c9, %c0_12, %c0_13], %7 {strides = array<i32>} : memref<2x10x10x16xf32, #tpu.memory_space<vmem>>, vector<2x1x10x16xf32>,
    %c0_14 = arith.constant 0 : index
    %c0_15 = arith.constant 0 : index
    %c0_16 = arith.constant 0 : index
    %c0_17 = arith.constant 0 : index
    %11 = vector.load %arg9[%c0_14, %c0_15, %c0_16, %c0_17] : memref<2x10x10x16xf32, #tpu.memory_space<vmem>>, vector<2x10x1x16xf32>
    tpu.vector_store %arg9[%c0_14, %c0_15, %c0_16, %c0_17], %8 {strides = array<i32>} : memref<2x10x10x16xf32, #tpu.memory_space<vmem>>, vector<2x10x1x16xf32>,
    %c0_18 = arith.constant 0 : index
    %c0_19 = arith.constant 0 : index
    %c9_20 = arith.constant 9 : index
    %c0_21 = arith.constant 0 : index
    %12 = vector.load %arg9[%c0_18, %c0_19, %c9_20, %c0_21] : memref<2x10x10x16xf32, #tpu.memory_space<vmem>>, vector<2x10x1x16xf32>
    tpu.vector_store %arg9[%c0_18, %c0_19, %c9_20, %c0_21], %8 {strides = array<i32>} : memref<2x10x10x16xf32, #tpu.memory_space<vmem>>, vector<2x10x1x16xf32>,
    %13 = vector.shape_cast %6 : vector<128x16xf32> to vector<2x8x8x16xf32>
    %c0_22 = arith.constant 0 : index
    %c1 = arith.constant 1 : index
    %c1_23 = arith.constant 1 : index
    %c0_24 = arith.constant 0 : index
    %14 = vector.load %arg9[%c0_22, %c1, %c1_23, %c0_24] : memref<2x10x10x16xf32, #tpu.memory_space<vmem>>, vector<2x8x8x16xf32>
    tpu.vector_store %arg9[%c0_22, %c1, %c1_23, %c0_24], %13 {strides = array<i32>} : memref<2x10x10x16xf32, #tpu.memory_space<vmem>>, vector<2x8x8x16xf32>,
    %c0_25 = arith.constant 0 : index
    %c0_26 = arith.constant 0 : index
    %c0_27 = arith.constant 0 : index
    %c0_28 = arith.constant 0 : index
    %15 = vector.load %arg9[%c0_25, %c0_26, %c0_27, %c0_28] : memref<2x10x10x16xf32, #tpu.memory_space<vmem>>, vector<2x8x8x16xf32>
    %16 = vector.shape_cast %15 : vector<2x8x8x16xf32> to vector<128x16xf32>
    %c0_29 = arith.constant 0 : index
    %c0_30 = arith.constant 0 : index
    %17 = vector.load %arg10[%c0_29, %c0_30] : memref<128x144xf32, #tpu.memory_space<vmem>>, vector<128x16xf32>
    tpu.vector_store %arg10[%c0_29, %c0_30], %16 {strides = array<i32>} : memref<128x144xf32, #tpu.memory_space<vmem>>, vector<128x16xf32>,
    %c0_31 = arith.constant 0 : index
    %c0_32 = arith.constant 0 : index
    %c1_33 = arith.constant 1 : index
    %c0_34 = arith.constant 0 : index
    %18 = vector.load %arg9[%c0_31, %c0_32, %c1_33, %c0_34] : memref<2x10x10x16xf32, #tpu.memory_space<vmem>>, vector<2x8x8x16xf32>
    %19 = vector.shape_cast %18 : vector<2x8x8x16xf32> to vector<128x16xf32>
    %c0_35 = arith.constant 0 : index
    %c16 = arith.constant 16 : index
    %20 = vector.load %arg10[%c0_35, %c16] : memref<128x144xf32, #tpu.memory_space<vmem>>, vector<128x16xf32>
    tpu.vector_store %arg10[%c0_35, %c16], %19 {strides = array<i32>} : memref<128x144xf32, #tpu.memory_space<vmem>>, vector<128x16xf32>,
    %c0_36 = arith.constant 0 : index
    %c0_37 = arith.constant 0 : index
    %c2 = arith.constant 2 : index
    %c0_38 = arith.constant 0 : index
    %21 = vector.load %arg9[%c0_36, %c0_37, %c2, %c0_38] : memref<2x10x10x16xf32, #tpu.memory_space<vmem>>, vector<2x8x8x16xf32>
    %22 = vector.shape_cast %21 : vector<2x8x8x16xf32> to vector<128x16xf32>
    %c0_39 = arith.constant 0 : index
    %c32 = arith.constant 32 : index
    %23 = vector.load %arg10[%c0_39, %c32] : memref<128x144xf32, #tpu.memory_space<vmem>>, vector<128x16xf32>
    tpu.vector_store %arg10[%c0_39, %c32], %22 {strides = array<i32>} : memref<128x144xf32, #tpu.memory_space<vmem>>, vector<128x16xf32>,
    %c0_40 = arith.constant 0 : index
    %c1_41 = arith.constant 1 : index
    %c0_42 = arith.constant 0 : index
    %c0_43 = arith.constant 0 : index
    %24 = vector.load %arg9[%c0_40, %c1_41, %c0_42, %c0_43] : memref<2x10x10x16xf32, #tpu.memory_space<vmem>>, vector<2x8x8x16xf32>
    %25 = vector.shape_cast %24 : vector<2x8x8x16xf32> to vector<128x16xf32>
    %c0_44 = arith.constant 0 : index
    %c48 = arith.constant 48 : index
    %26 = vector.load %arg10[%c0_44, %c48] : memref<128x144xf32, #tpu.memory_space<vmem>>, vector<128x16xf32>
    tpu.vector_store %arg10[%c0_44, %c48], %25 {strides = array<i32>} : memref<128x144xf32, #tpu.memory_space<vmem>>, vector<128x16xf32>,
    %c0_45 = arith.constant 0 : index
    %c1_46 = arith.constant 1 : index
    %c1_47 = arith.constant 1 : index
    %c0_48 = arith.constant 0 : index
    %27 = vector.load %arg9[%c0_45, %c1_46, %c1_47, %c0_48] : memref<2x10x10x16xf32, #tpu.memory_space<vmem>>, vector<2x8x8x16xf32>
    %28 = vector.shape_cast %27 : vector<2x8x8x16xf32> to vector<128x16xf32>
    %c0_49 = arith.constant 0 : index
    %c64 = arith.constant 64 : index
    %29 = vector.load %arg10[%c0_49, %c64] : memref<128x144xf32, #tpu.memory_space<vmem>>, vector<128x16xf32>
    tpu.vector_store %arg10[%c0_49, %c64], %28 {strides = array<i32>} : memref<128x144xf32, #tpu.memory_space<vmem>>, vector<128x16xf32>,
    %c0_50 = arith.constant 0 : index
    %c1_51 = arith.constant 1 : index
    %c2_52 = arith.constant 2 : index
    %c0_53 = arith.constant 0 : index
    %30 = vector.load %arg9[%c0_50, %c1_51, %c2_52, %c0_53] : memref<2x10x10x16xf32, #tpu.memory_space<vmem>>, vector<2x8x8x16xf32>
    %31 = vector.shape_cast %30 : vector<2x8x8x16xf32> to vector<128x16xf32>
    %c0_54 = arith.constant 0 : index
    %c80 = arith.constant 80 : index
    %32 = vector.load %arg10[%c0_54, %c80] : memref<128x144xf32, #tpu.memory_space<vmem>>, vector<128x16xf32>
    tpu.vector_store %arg10[%c0_54, %c80], %31 {strides = array<i32>} : memref<128x144xf32, #tpu.memory_space<vmem>>, vector<128x16xf32>,
    %c0_55 = arith.constant 0 : index
    %c2_56 = arith.constant 2 : index
    %c0_57 = arith.constant 0 : index
    %c0_58 = arith.constant 0 : index
    %33 = vector.load %arg9[%c0_55, %c2_56, %c0_57, %c0_58] : memref<2x10x10x16xf32, #tpu.memory_space<vmem>>, vector<2x8x8x16xf32>
    %34 = vector.shape_cast %33 : vector<2x8x8x16xf32> to vector<128x16xf32>
    %c0_59 = arith.constant 0 : index
    %c96 = arith.constant 96 : index
    %35 = vector.load %arg10[%c0_59, %c96] : memref<128x144xf32, #tpu.memory_space<vmem>>, vector<128x16xf32>
    tpu.vector_store %arg10[%c0_59, %c96], %34 {strides = array<i32>} : memref<128x144xf32, #tpu.memory_space<vmem>>, vector<128x16xf32>,
    %c0_60 = arith.constant 0 : index
    %c2_61 = arith.constant 2 : index
    %c1_62 = arith.constant 1 : index
    %c0_63 = arith.constant 0 : index
    %36 = vector.load %arg9[%c0_60, %c2_61, %c1_62, %c0_63] : memref<2x10x10x16xf32, #tpu.memory_space<vmem>>, vector<2x8x8x16xf32>
    %37 = vector.shape_cast %36 : vector<2x8x8x16xf32> to vector<128x16xf32>
    %c0_64 = arith.constant 0 : index
    %c112 = arith.constant 112 : index
    %38 = vector.load %arg10[%c0_64, %c112] : memref<128x144xf32, #tpu.memory_space<vmem>>, vector<128x16xf32>
    tpu.vector_store %arg10[%c0_64, %c112], %37 {strides = array<i32>} : memref<128x144xf32, #tpu.memory_space<vmem>>, vector<128x16xf32>,
    %c0_65 = arith.constant 0 : index
    %c2_66 = arith.constant 2 : index
    %c2_67 = arith.constant 2 : index
    %c0_68 = arith.constant 0 : index
    %39 = vector.load %arg9[%c0_65, %c2_66, %c2_67, %c0_68] : memref<2x10x10x16xf32, #tpu.memory_space<vmem>>, vector<2x8x8x16xf32>
    %40 = vector.shape_cast %39 : vector<2x8x8x16xf32> to vector<128x16xf32>
    %c0_69 = arith.constant 0 : index
    %c128 = arith.constant 128 : index
    %41 = vector.load %arg10[%c0_69, %c128] : memref<128x144xf32, #tpu.memory_space<vmem>>, vector<128x16xf32>
    tpu.vector_store %arg10[%c0_69, %c128], %40 {strides = array<i32>} : memref<128x144xf32, #tpu.memory_space<vmem>>, vector<128x16xf32>,
    %c0_70 = arith.constant 0 : index
    %c0_71 = arith.constant 0 : index
    %42 = vector.load %arg10[%c0_70, %c0_71] : memref<128x144xf32, #tpu.memory_space<vmem>>, vector<128x144xf32>
    %c0_72 = arith.constant 0 : index
    %c0_73 = arith.constant 0 : index
    %43 = vector.load %arg4[%c0_72, %c0_73] : memref<144x32xf32, #tpu.memory_space<vmem>>, vector<144x32xf32>
    %cst_74 = arith.constant dense<0.000000e+00> : vector<128x32xf32>
    %44 = tpu.matmul %42, %43, %cst_74 {dimension_numbers = #tpu.dot_dimension_numbers<[1], [0], [0], [1], [0, 0, 1, 1], [], []>} : vector<128x144xf32>, vector<144x32xf32>, vector<128x32xf32> -> vector<128x32xf32>
    %c0_75 = arith.constant 0 : index
    %c0_76 = arith.constant 0 : index
    %45 = vector.load %arg5[%c0_75, %c0_76] : memref<1x32xf32, #tpu.memory_space<vmem>>, vector<1x32xf32>
    %46 = vector.broadcast %45 : vector<1x32xf32> to vector<128x32xf32>
    %47 = arith.addf %44, %46 : vector<128x32xf32>
    %48 = math.tanh %47 : vector<128x32xf32>
    %c0_77 = arith.constant 0 : index
    %c0_78 = arith.constant 0 : index
    %49 = vector.load %arg6[%c0_77, %c0_78] : memref<32x32xf32, #tpu.memory_space<vmem>>, vector<32x32xf32>
    %cst_79 = arith.constant dense<0.000000e+00> : vector<32x128xf32>
    %50 = tpu.matmul %49, %48, %cst_79 {dimension_numbers = #tpu.dot_dimension_numbers<[1], [1], [0], [0], [0, 0, 1, 0], [], []>} : vector<32x32xf32>, vector<128x32xf32>, vector<32x128xf32> -> vector<32x128xf32>
    %c0_80 = arith.constant 0 : index
    %c0_81 = arith.constant 0 : index
    %51 = vector.load %arg7[%c0_80, %c0_81] : memref<32x1xf32, #tpu.memory_space<vmem>>, vector<32x1xf32>
    %52 = vector.broadcast %51 : vector<32x1xf32> to vector<32x128xf32>
    %53 = arith.addf %50, %52 : vector<32x128xf32>
    %c0_82 = arith.constant 0 : index
    %c0_83 = arith.constant 0 : index
    %54 = vector.load %arg8[%c0_82, %c0_83] : memref<32x128xf32, #tpu.memory_space<vmem>>, vector<32x128xf32>
    tpu.vector_store %arg8[%c0_82, %c0_83], %53 {strides = array<i32>} : memref<32x128xf32, #tpu.memory_space<vmem>>, vector<32x128xf32>,
    return
  }
  func.func @transform_0(%arg0: i32) -> (i32, i32) {
    %c0_i32 = arith.constant 0 : i32
    %c0_i32_0 = arith.constant 0 : i32
    return %arg0, %c0_i32 : i32, i32
  }
  func.func @transform_1(%arg0: i32) -> (i32, i32) {
    %c0_i32 = arith.constant 0 : i32
    %c0_i32_0 = arith.constant 0 : i32
    %c0_i32_1 = arith.constant 0 : i32
    return %c0_i32, %c0_i32_0 : i32, i32
  }
  func.func @transform_2(%arg0: i32) -> (i32, i32) {
    %c0_i32 = arith.constant 0 : i32
    %c0_i32_0 = arith.constant 0 : i32
    %c0_i32_1 = arith.constant 0 : i32
    return %c0_i32, %c0_i32_0 : i32, i32
  }
  func.func @transform_3(%arg0: i32) -> (i32, i32) {
    %c0_i32 = arith.constant 0 : i32
    %c0_i32_0 = arith.constant 0 : i32
    %c0_i32_1 = arith.constant 0 : i32
    return %c0_i32, %c0_i32_0 : i32, i32
  }
  func.func @transform_4(%arg0: i32) -> (i32, i32) {
    %c0_i32 = arith.constant 0 : i32
    %c0_i32_0 = arith.constant 0 : i32
    %c0_i32_1 = arith.constant 0 : i32
    return %c0_i32, %c0_i32_0 : i32, i32
  }
  func.func @transform_5(%arg0: i32) -> (i32, i32) {
    %c0_i32 = arith.constant 0 : i32
    %c0_i32_0 = arith.constant 0 : i32
    %c0_i32_1 = arith.constant 0 : i32
    return %c0_i32, %c0_i32_0 : i32, i32
  }
  func.func @transform_6(%arg0: i32) -> (i32, i32) {
    %c0_i32 = arith.constant 0 : i32
    %c0_i32_0 = arith.constant 0 : i32
    %c0_i32_1 = arith.constant 0 : i32
    return %c0_i32, %c0_i32_0 : i32, i32
  }
  func.func @transform_7(%arg0: i32) -> (i32, i32) {
    %c0_i32 = arith.constant 0 : i32
    %c0_i32_0 = arith.constant 0 : i32
    return %c0_i32, %arg0 : i32, i32
  }
}

</mosaic_0001>

<llo_original>
// kernel: encoder1_forward.1
$region0: #{encoder1_forward.1}
  #allocation0 [shape = 'u32[]', space=smem, size = 0x4, offset = 0x4, fixed_abs, tag = 'smem constant byte address 0x4 - core index']
  #allocation1 [shape = 'u32[144,128]{1,0:T(1,128)}', space=vmem, size = 0x12000, scoped, tag = 'internal scratch']
  #allocation2 [shape = 'f32[2,10,10,16]{3,2,1,0:T(8,128)}', space=vmem, size = 0x28000, scoped, tag = 'scratch operand']
  #allocation3 [shape = 'f32[128,144]{1,0:T(8,128)}', space=vmem, size = 0x20000, scoped, tag = 'scratch operand']
  %s0 = inlined_call_operand.vmem [shape: f32[128,36], index: 0, kind: input, shape index: {}]
  %s1 = inlined_call_operand.vmem [shape: f32[36,16], index: 1, kind: input, shape index: {}]
  %s2 = inlined_call_operand.vmem [shape: f32[1,16], index: 2, kind: input, shape index: {}]
  %s3 = inlined_call_operand.vmem [shape: f32[144,32], index: 3, kind: input, shape index: {}]
  %s4 = inlined_call_operand.vmem [shape: f32[1,32], index: 4, kind: input, shape index: {}]
  %s5 = inlined_call_operand.vmem [shape: f32[32,32], index: 5, kind: input, shape index: {}]
  %s6 = inlined_call_operand.vmem [shape: f32[32,1], index: 6, kind: input, shape index: {}]
  %s7 = inlined_call_operand.vmem [shape: f32[32,128], index: 7, kind: output, shape index: {}]
  %s8 = sld [smem:[#allocation0]]
  $region38: #{encoder1_forward.1} parent=0
    _
  %s10 = ssub.s32 1, %s8
  %s11 = scalar_select 0, %s10, %s8
  // Predicated region
  $region2: #{encoder1_forward.1} parent=0 // pred_check
    _
  $region3: #{encoder1_forward.1} parent=0 // pred_check_branch
    %13 = sbr.rel (0) target = $region5
  $region4: #{encoder1_forward.1} parent=0 // pred_region
    _
  $region5: #{encoder1_forward.1} parent=0 // pred_fallthru
    _
  // Predicated region
  $region6: #{encoder1_forward.1} parent=0 // pred_check
    _
  $region7: #{encoder1_forward.1} parent=0 // pred_check_branch
    %15 = sbr.rel (0) target = $region9
  $region8: #{encoder1_forward.1} parent=0 // pred_region
    _
  $region9: #{encoder1_forward.1} parent=0 // pred_fallthru
    _
  // Predicated region
  $region10: #{encoder1_forward.1} parent=0 // pred_check
    _
  $region11: #{encoder1_forward.1} parent=0 // pred_check_branch
    %17 = sbr.rel (0) target = $region13
  $region12: #{encoder1_forward.1} parent=0 // pred_region
    _
  $region13: #{encoder1_forward.1} parent=0 // pred_fallthru
    _
  // Predicated region
  $region14: #{encoder1_forward.1} parent=0 // pred_check
    _
  $region15: #{encoder1_forward.1} parent=0 // pred_check_branch
    %19 = sbr.rel (0) target = $region17
  $region16: #{encoder1_forward.1} parent=0 // pred_region
    _
  $region17: #{encoder1_forward.1} parent=0 // pred_fallthru
    _
  // Predicated region
  $region18: #{encoder1_forward.1} parent=0 // pred_check
    _
  $region19: #{encoder1_forward.1} parent=0 // pred_check_branch
    %21 = sbr.rel (0) target = $region21
  $region20: #{encoder1_forward.1} parent=0 // pred_region
    _
  $region21: #{encoder1_forward.1} parent=0 // pred_fallthru
    _
  // Predicated region
  $region22: #{encoder1_forward.1} parent=0 // pred_check
    _
  $region23: #{encoder1_forward.1} parent=0 // pred_check_branch
    %23 = sbr.rel (0) target = $region25
  $region24: #{encoder1_forward.1} parent=0 // pred_region
    _
  $region25: #{encoder1_forward.1} parent=0 // pred_fallthru
    _
  // Predicated region
  $region26: #{encoder1_forward.1} parent=0 // pred_check
    _
  $region27: #{encoder1_forward.1} parent=0 // pred_check_branch
    %25 = sbr.rel (0) target = $region29
  $region28: #{encoder1_forward.1} parent=0 // pred_region
    _
  $region29: #{encoder1_forward.1} parent=0 // pred_fallthru
    _
  %v26 = vld [vmem:[%s0] sm:$0xff]
  %v27 = vld [vmem:[%s0 + $0x8] sm:$0xff]
  %v28 = vld [vmem:[%s0 + $0x10] sm:$0xff]
  %v29 = vld [vmem:[%s0 + $0x18] sm:$0xff]
  %v30 = vld [vmem:[%s0 + $0x20] sm:$0xff]
  %v31 = vld [vmem:[%s0 + $0x28] sm:$0xff]
  %v32 = vld [vmem:[%s0 + $0x30] sm:$0xff]
  %v33 = vld [vmem:[%s0 + $0x38] sm:$0xff]
  %v34 = vld [vmem:[%s0 + $0x40] sm:$0xff]
  %v35 = vld [vmem:[%s0 + $0x48] sm:$0xff]
  %v36 = vld [vmem:[%s0 + $0x50] sm:$0xff]
  %v37 = vld [vmem:[%s0 + $0x58] sm:$0xff]
  %v38 = vld [vmem:[%s0 + $0x60] sm:$0xff]
  %v39 = vld [vmem:[%s0 + $0x68] sm:$0xff]
  %v40 = vld [vmem:[%s0 + $0x70] sm:$0xff]
  %v41 = vld [vmem:[%s0 + $0x78] sm:$0xff]
  %v42 = vld [vmem:[%s1] sm:$0xff]
  %v43 = vld [vmem:[%s1 + $0x8] sm:$0xff]
  %v44 = vld [vmem:[%s1 + $0x10] sm:$0xff]
  %v45 = vld [vmem:[%s1 + $0x18] sm:$0xff]
  %v46 = vld [vmem:[%s1 + $0x20] sm:$0xf]
  %v47 = vld [vmem:[%s2] sm:$0x1]
  %v49 = vlaneseq
  %v50 = vshrl.u32 %v49, 7
  %v51 = vsub.s32 0, %v50
  %v52 = vrot.slane %v47, %v51
  %vm54 = vcmask 293888
  %v56 = vsel %vm54, %v26, 0
  %v59 = vsel %vm54, %v27, 0
  %v62 = vsel %vm54, %v28, 0
  %v65 = vsel %vm54, %v29, 0
  %v68 = vsel %vm54, %v30, 0
  %v71 = vsel %vm54, %v31, 0
  %v74 = vsel %vm54, %v32, 0
  %v77 = vsel %vm54, %v33, 0
  %v80 = vsel %vm54, %v34, 0
  %v83 = vsel %vm54, %v35, 0
  %v86 = vsel %vm54, %v36, 0
  %v89 = vsel %vm54, %v37, 0
  %v92 = vsel %vm54, %v38, 0
  %v95 = vsel %vm54, %v39, 0
  %v98 = vsel %vm54, %v40, 0
  %v101 = vsel %vm54, %v41, 0
  %vm103 = vcmask 1043456
  %v105 = vsel %vm103, %v46, 0
  %107 = vmatprep.subr.mxu0 0.0
  %108 = vmatpush1.msra.mxu0 0.0
  %109 = vmatprep.subr.mxu0 0.0
  %110 = vmatpush1.msra.mxu0 0.0
  %111 = vmatprep.subr.mxu0 0.0
  %112 = vmatpush1.msra.mxu0 0.0
  %113 = vmatprep.subr.mxu0 0.0
  %114 = vmatpush1.msra.mxu0 0.0
  %115 = vmatprep.subr.mxu0 0.0
  %116 = vmatpush1.msra.mxu0 0.0
  %117 = vmatprep.subr.mxu0 0.0
  %118 = vmatpush1.msra.mxu0 0.0
  %119 = vmatprep.subr.mxu0 0.0
  %120 = vmatpush1.msra.mxu0 0.0
  %121 = vmatprep.subr.mxu0 0.0
  %122 = vmatpush1.msra.mxu0 0.0
  %123 = vmatprep.subr.mxu0 0.0
  %124 = vmatpush1.msra.mxu0 0.0
  %125 = vmatprep.subr.mxu0 0.0
  %126 = vmatpush1.msra.mxu0 0.0
  %127 = vmatprep.subr.mxu0 0.0
  %128 = vmatpush1.msra.mxu0 0.0
  %129 = vmatprep.subr.mxu0 0.0
  %130 = vmatpush1.msra.mxu0 %v105
  %131 = vmatprep.subr.mxu0 0.0
  %132 = vmatpush1.msra.mxu0 %v45
  %133 = vmatprep.subr.mxu0 0.0
  %134 = vmatpush1.msra.mxu0 %v44
  %135 = vmatprep.subr.mxu0 0.0
  %136 = vmatpush1.msra.mxu0 %v43
  %137 = vmatprep.subr.mxu0 0.0
  %138 = vmatpush1.msra.mxu0 %v42
  %139 = vmatprep.subr.mxu0 0.0
  %140 = vmatpush2.msra.mxu0 0.0
  %141 = vmatprep.subr.mxu0 0.0
  %142 = vmatpush2.msra.mxu0 0.0
  %143 = vmatprep.subr.mxu0 0.0
  %144 = vmatpush2.msra.mxu0 0.0
  %145 = vmatprep.subr.mxu0 0.0
  %146 = vmatpush2.msra.mxu0 0.0
  %147 = vmatprep.subr.mxu0 0.0
  %148 = vmatpush2.msra.mxu0 0.0
  %149 = vmatprep.subr.mxu0 0.0
  %150 = vmatpush2.msra.mxu0 0.0
  %151 = vmatprep.subr.mxu0 0.0
  %152 = vmatpush2.msra.mxu0 0.0
  %153 = vmatprep.subr.mxu0 0.0
  %154 = vmatpush2.msra.mxu0 0.0
  %155 = vmatprep.subr.mxu0 0.0
  %156 = vmatpush2.msra.mxu0 0.0
  %157 = vmatprep.subr.mxu0 0.0
  %158 = vmatpush2.msra.mxu0 0.0
  %159 = vmatprep.subr.mxu0 0.0
  %160 = vmatpush2.msra.mxu0 0.0
  %161 = vmatprep.subr.mxu0 0.0
  %162 = vmatpush2.msra.mxu0 0.0
  %163 = vmatprep.subr.mxu0 0.0
  %164 = vmatpush2.msra.mxu0 0.0
  %165 = vmatprep.subr.mxu0 0.0
  %166 = vmatpush2.msra.mxu0 0.0
  %167 = vmatprep.subr.mxu0 0.0
  %168 = vmatpush2.msra.mxu0 0.0
  %169 = vmatprep.subr.mxu0 0.0
  %170 = vmatpush2.msra.mxu0 0.0
  %171 = vmatprep.mubr.f32.mxu0 0.0
  %172 = vmatmul.mubr.f32.gmra.mxu0 %v56
  %v173 = vpop.f32.mrf.mxu0
  %v174 = vadd.f32 %v52, %v173
  %v175 = vpop.f32.mrf.mxu0
  %176 = vmatprep.mubr.f32.mxu0 0.0
  %177 = vmatmul.mubr.f32.gmra.mxu0 %v59
  %v178 = vpop.f32.mrf.mxu0
  %v179 = vadd.f32 %v52, %v178
  %v180 = vpop.f32.mrf.mxu0
  %181 = vmatprep.mubr.f32.mxu0 0.0
  %182 = vmatmul.mubr.f32.gmra.mxu0 %v62
  %v183 = vpop.f32.mrf.mxu0
  %v184 = vadd.f32 %v52, %v183
  %v185 = vpop.f32.mrf.mxu0
  %186 = vmatprep.mubr.f32.mxu0 0.0
  %187 = vmatmul.mubr.f32.gmra.mxu0 %v65
  %v188 = vpop.f32.mrf.mxu0
  %v189 = vadd.f32 %v52, %v188
  %v190 = vpop.f32.mrf.mxu0
  %191 = vmatprep.mubr.f32.mxu0 0.0
  %192 = vmatmul.mubr.f32.gmra.mxu0 %v68
  %v193 = vpop.f32.mrf.mxu0
  %v194 = vadd.f32 %v52, %v193
  %v195 = vpop.f32.mrf.mxu0
  %196 = vmatprep.mubr.f32.mxu0 0.0
  %197 = vmatmul.mubr.f32.gmra.mxu0 %v71
  %v198 = vpop.f32.mrf.mxu0
  %v199 = vadd.f32 %v52, %v198
  %v200 = vpop.f32.mrf.mxu0
  %201 = vmatprep.mubr.f32.mxu0 0.0
  %202 = vmatmul.mubr.f32.gmra.mxu0 %v74
  %v203 = vpop.f32.mrf.mxu0
  %v204 = vadd.f32 %v52, %v203
  %v205 = vpop.f32.mrf.mxu0
  %206 = vmatprep.mubr.f32.mxu0 0.0
  %207 = vmatmul.mubr.f32.gmra.mxu0 %v77
  %v208 = vpop.f32.mrf.mxu0
  %v209 = vadd.f32 %v52, %v208
  %v210 = vpop.f32.mrf.mxu0
  %211 = vmatprep.mubr.f32.mxu0 0.0
  %212 = vmatmul.mubr.f32.gmra.mxu0 %v80
  %v213 = vpop.f32.mrf.mxu0
  %v214 = vadd.f32 %v52, %v213
  %v215 = vpop.f32.mrf.mxu0
  %216 = vmatprep.mubr.f32.mxu0 0.0
  %217 = vmatmul.mubr.f32.gmra.mxu0 %v83
  %v218 = vpop.f32.mrf.mxu0
  %v219 = vadd.f32 %v52, %v218
  %v220 = vpop.f32.mrf.mxu0
  %221 = vmatprep.mubr.f32.mxu0 0.0
  %222 = vmatmul.mubr.f32.gmra.mxu0 %v86
  %v223 = vpop.f32.mrf.mxu0
  %v224 = vadd.f32 %v52, %v223
  %v225 = vpop.f32.mrf.mxu0
  %226 = vmatprep.mubr.f32.mxu0 0.0
  %227 = vmatmul.mubr.f32.gmra.mxu0 %v89
  %v228 = vpop.f32.mrf.mxu0
  %v229 = vadd.f32 %v52, %v228
  %v230 = vpop.f32.mrf.mxu0
  %231 = vmatprep.mubr.f32.mxu0 0.0
  %232 = vmatmul.mubr.f32.gmra.mxu0 %v92
  %v233 = vpop.f32.mrf.mxu0
  %v234 = vadd.f32 %v52, %v233
  %v235 = vpop.f32.mrf.mxu0
  %236 = vmatprep.mubr.f32.mxu0 0.0
  %237 = vmatmul.mubr.f32.gmra.mxu0 %v95
  %v238 = vpop.f32.mrf.mxu0
  %v239 = vadd.f32 %v52, %v238
  %v240 = vpop.f32.mrf.mxu0
  %241 = vmatprep.mubr.f32.mxu0 0.0
  %242 = vmatmul.mubr.f32.gmra.mxu0 %v98
  %v243 = vpop.f32.mrf.mxu0
  %v244 = vadd.f32 %v52, %v243
  %v245 = vpop.f32.mrf.mxu0
  %246 = vmatprep.mubr.f32.mxu0 0.0
  %247 = vmatmul.mubr.f32.gmra.mxu0 %v101
  %v248 = vpop.f32.mrf.mxu0
  %v249 = vadd.f32 %v52, %v248
  %v250 = vpop.f32.mrf.mxu0
  %251 = vdwg.mxu0
  %v252 = vtanh.pop %v174
  %v253 = vtanh.pop %v179
  %v254 = vtanh.pop %v184
  %v255 = vtanh.pop %v189
  %v256 = vtanh.pop %v194
  %v257 = vtanh.pop %v199
  %v258 = vtanh.pop %v204
  %v259 = vtanh.pop %v209
  %v260 = vtanh.pop %v214
  %v261 = vtanh.pop %v219
  %v262 = vtanh.pop %v224
  %v263 = vtanh.pop %v229
  %v264 = vtanh.pop %v234
  %v265 = vtanh.pop %v239
  %v266 = vtanh.pop %v244
  %v267 = vtanh.pop %v249
  %vm268 = vcmask 130048
  %269 = vst.msk [vmem:[#allocation2] sm:$0xff] %vm268, 0.0
  %vm270 = vcmask 123904
  %271 = vst.msk [vmem:[#allocation2 + $0x8] sm:$0x3] %vm270, 0.0
  %272 = vst.msk [vmem:[#allocation2 + $0xa0] sm:$0xff] %vm268, 0.0
  %273 = vst.msk [vmem:[#allocation2 + $0xa8] sm:$0x3] %vm270, 0.0
  %s274 = scalar_lea.vmem [#allocation2], 144
  %275 = vst.msk [vmem:[%s274] sm:$0xff] %vm268, 0.0
  %276 = vst.msk [vmem:[%s274 + $0x8] sm:$0x3] %vm270, 0.0
  %277 = vst.msk [vmem:[%s274 + $0xa0] sm:$0xff] %vm268, 0.0
  %278 = vst.msk [vmem:[%s274 + $0xa8] sm:$0x3] %vm270, 0.0
  %vm279 = vcmask 122880
  %280 = vst.msk [vmem:[#allocation2] sm:$0x1] %vm279, 0.0
  %281 = vst.msk [vmem:[#allocation2 + $0x10] sm:$0x1] %vm279, 0.0
  %282 = vst.msk [vmem:[#allocation2 + $0x20] sm:$0x1] %vm279, 0.0
  %283 = vst.msk [vmem:[#allocation2 + $0x30] sm:$0x1] %vm279, 0.0
  %284 = vst.msk [vmem:[#allocation2 + $0x40] sm:$0x1] %vm279, 0.0
  %285 = vst.msk [vmem:[#allocation2 + $0x50] sm:$0x1] %vm279, 0.0
  %286 = vst.msk [vmem:[#allocation2 + $0x60] sm:$0x1] %vm279, 0.0
  %287 = vst.msk [vmem:[#allocation2 + $0x70] sm:$0x1] %vm279, 0.0
  %288 = vst.msk [vmem:[#allocation2 + $0x80] sm:$0x1] %vm279, 0.0
  %289 = vst.msk [vmem:[#allocation2 + $0x90] sm:$0x1] %vm279, 0.0
  %290 = vst.msk [vmem:[#allocation2 + $0xa0] sm:$0x1] %vm279, 0.0
  %291 = vst.msk [vmem:[#allocation2 + $0xb0] sm:$0x1] %vm279, 0.0
  %292 = vst.msk [vmem:[#allocation2 + $0xc0] sm:$0x1] %vm279, 0.0
  %293 = vst.msk [vmem:[#allocation2 + $0xd0] sm:$0x1] %vm279, 0.0
  %294 = vst.msk [vmem:[#allocation2 + $0xe0] sm:$0x1] %vm279, 0.0
  %295 = vst.msk [vmem:[#allocation2 + $0xf0] sm:$0x1] %vm279, 0.0
  %296 = vst.msk [vmem:[#allocation2 + $0x100] sm:$0x1] %vm279, 0.0
  %297 = vst.msk [vmem:[#allocation2 + $0x110] sm:$0x1] %vm279, 0.0
  %298 = vst.msk [vmem:[#allocation2 + $0x120] sm:$0x1] %vm279, 0.0
  %299 = vst.msk [vmem:[#allocation2 + $0x130] sm:$0x1] %vm279, 0.0
  %300 = vst.msk [vmem:[#allocation2 + $0x9] sm:$0x1] %vm279, 0.0
  %301 = vst.msk [vmem:[#allocation2 + $0x19] sm:$0x1] %vm279, 0.0
  %302 = vst.msk [vmem:[#allocation2 + $0x29] sm:$0x1] %vm279, 0.0
  %303 = vst.msk [vmem:[#allocation2 + $0x39] sm:$0x1] %vm279, 0.0
  %304 = vst.msk [vmem:[#allocation2 + $0x49] sm:$0x1] %vm279, 0.0
  %305 = vst.msk [vmem:[#allocation2 + $0x59] sm:$0x1] %vm279, 0.0
  %306 = vst.msk [vmem:[#allocation2 + $0x69] sm:$0x1] %vm279, 0.0
  %307 = vst.msk [vmem:[#allocation2 + $0x79] sm:$0x1] %vm279, 0.0
  %308 = vst.msk [vmem:[#allocation2 + $0x89] sm:$0x1] %vm279, 0.0
  %309 = vst.msk [vmem:[#allocation2 + $0x99] sm:$0x1] %vm279, 0.0
  %310 = vst.msk [vmem:[#allocation2 + $0xa9] sm:$0x1] %vm279, 0.0
  %311 = vst.msk [vmem:[#allocation2 + $0xb9] sm:$0x1] %vm279, 0.0
  %312 = vst.msk [vmem:[#allocation2 + $0xc9] sm:$0x1] %vm279, 0.0
  %313 = vst.msk [vmem:[#allocation2 + $0xd9] sm:$0x1] %vm279, 0.0
  %314 = vst.msk [vmem:[#allocation2 + $0xe9] sm:$0x1] %vm279, 0.0
  %315 = vst.msk [vmem:[#allocation2 + $0xf9] sm:$0x1] %vm279, 0.0
  %316 = vst.msk [vmem:[#allocation2 + $0x109] sm:$0x1] %vm279, 0.0
  %317 = vst.msk [vmem:[#allocation2 + $0x119] sm:$0x1] %vm279, 0.0
  %318 = vst.msk [vmem:[#allocation2 + $0x129] sm:$0x1] %vm279, 0.0
  %319 = vst.msk [vmem:[#allocation2 + $0x139] sm:$0x1] %vm279, 0.0
  %s320 = scalar_lea.vmem [#allocation2], 16
  %321 = vst.msk [vmem:[%s320 + $0x1] sm:$0xff] %vm268, %v252
  %322 = vst.msk [vmem:[%s320 + $0x11] sm:$0xff] %vm268, %v253
  %323 = vst.msk [vmem:[%s320 + $0x21] sm:$0xff] %vm268, %v254
  %324 = vst.msk [vmem:[%s320 + $0x31] sm:$0xff] %vm268, %v255
  %325 = vst.msk [vmem:[%s320 + $0x41] sm:$0xff] %vm268, %v256
  %326 = vst.msk [vmem:[%s320 + $0x51] sm:$0xff] %vm268, %v257
  %327 = vst.msk [vmem:[%s320 + $0x61] sm:$0xff] %vm268, %v258
  %328 = vst.msk [vmem:[%s320 + $0x71] sm:$0xff] %vm268, %v259
  %329 = vst.msk [vmem:[%s320 + $0xa1] sm:$0xff] %vm268, %v260
  %330 = vst.msk [vmem:[%s320 + $0xb1] sm:$0xff] %vm268, %v261
  %331 = vst.msk [vmem:[%s320 + $0xc1] sm:$0xff] %vm268, %v262
  %332 = vst.msk [vmem:[%s320 + $0xd1] sm:$0xff] %vm268, %v263
  %333 = vst.msk [vmem:[%s320 + $0xe1] sm:$0xff] %vm268, %v264
  %334 = vst.msk [vmem:[%s320 + $0xf1] sm:$0xff] %vm268, %v265
  %335 = vst.msk [vmem:[%s320 + $0x101] sm:$0xff] %vm268, %v266
  %336 = vst.msk [vmem:[%s320 + $0x111] sm:$0xff] %vm268, %v267
  %v337 = vld [vmem:[#allocation2] sm:$0xff]
  %v338 = vld [vmem:[#allocation2 + $0x10] sm:$0xff]
  %v339 = vld [vmem:[#allocation2 + $0x20] sm:$0xff]
  %v340 = vld [vmem:[#allocation2 + $0x30] sm:$0xff]
  %v341 = vld [vmem:[#allocation2 + $0x40] sm:$0xff]
  %v342 = vld [vmem:[#allocation2 + $0x50] sm:$0xff]
  %v343 = vld [vmem:[#allocation2 + $0x60] sm:$0xff]
  %v344 = vld [vmem:[#allocation2 + $0x70] sm:$0xff]
  %v345 = vld [vmem:[#allocation2 + $0xa0] sm:$0xff]
  %v346 = vld [vmem:[#allocation2 + $0xb0] sm:$0xff]
  %v347 = vld [vmem:[#allocation2 + $0xc0] sm:$0xff]
  %v348 = vld [vmem:[#allocation2 + $0xd0] sm:$0xff]
  %v349 = vld [vmem:[#allocation2 + $0xe0] sm:$0xff]
  %v350 = vld [vmem:[#allocation2 + $0xf0] sm:$0xff]
  %v351 = vld [vmem:[#allocation2 + $0x100] sm:$0xff]
  %v352 = vld [vmem:[#allocation2 + $0x110] sm:$0xff]
  %353 = vst.msk [vmem:[#allocation3] sm:$0xff] %vm268, %v337
  %354 = vst.msk [vmem:[#allocation3 + $0x10] sm:$0xff] %vm268, %v338
  %355 = vst.msk [vmem:[#allocation3 + $0x20] sm:$0xff] %vm268, %v339
  %356 = vst.msk [vmem:[#allocation3 + $0x30] sm:$0xff] %vm268, %v340
  %357 = vst.msk [vmem:[#allocation3 + $0x40] sm:$0xff] %vm268, %v341
  %358 = vst.msk [vmem:[#allocation3 + $0x50] sm:$0xff] %vm268, %v342
  %359 = vst.msk [vmem:[#allocation3 + $0x60] sm:$0xff] %vm268, %v343
  %360 = vst.msk [vmem:[#allocation3 + $0x70] sm:$0xff] %vm268, %v344
  %361 = vst.msk [vmem:[#allocation3 + $0x80] sm:$0xff] %vm268, %v345
  %362 = vst.msk [vmem:[#allocation3 + $0x90] sm:$0xff] %vm268, %v346
  %363 = vst.msk [vmem:[#allocation3 + $0xa0] sm:$0xff] %vm268, %v347
  %364 = vst.msk [vmem:[#allocation3 + $0xb0] sm:$0xff] %vm268, %v348
  %365 = vst.msk [vmem:[#allocation3 + $0xc0] sm:$0xff] %vm268, %v349
  %366 = vst.msk [vmem:[#allocation3 + $0xd0] sm:$0xff] %vm268, %v350
  %367 = vst.msk [vmem:[#allocation3 + $0xe0] sm:$0xff] %vm268, %v351
  %368 = vst.msk [vmem:[#allocation3 + $0xf0] sm:$0xff] %vm268, %v352
  %v369 = vld [vmem:[#allocation2 + $0x1] sm:$0xff]
  %v370 = vld [vmem:[#allocation2 + $0x11] sm:$0xff]
  %v371 = vld [vmem:[#allocation2 + $0x21] sm:$0xff]
  %v372 = vld [vmem:[#allocation2 + $0x31] sm:$0xff]
  %v373 = vld [vmem:[#allocation2 + $0x41] sm:$0xff]
  %v374 = vld [vmem:[#allocation2 + $0x51] sm:$0xff]
  %v375 = vld [vmem:[#allocation2 + $0x61] sm:$0xff]
  %v376 = vld [vmem:[#allocation2 + $0x71] sm:$0xff]
  %v377 = vld [vmem:[#allocation2 + $0xa1] sm:$0xff]
  %v378 = vld [vmem:[#allocation2 + $0xb1] sm:$0xff]
  %v379 = vld [vmem:[#allocation2 + $0xc1] sm:$0xff]
  %v380 = vld [vmem:[#allocation2 + $0xd1] sm:$0xff]
  %v381 = vld [vmem:[#allocation2 + $0xe1] sm:$0xff]
  %v382 = vld [vmem:[#allocation2 + $0xf1] sm:$0xff]
  %v383 = vld [vmem:[#allocation2 + $0x101] sm:$0xff]
  %v384 = vld [vmem:[#allocation2 + $0x111] sm:$0xff]
  %401 = vrot.lane.b32.xlu0 %v369, 16
  %v402 = vpop.permute.xlu0 %401
  %403 = vrot.lane.b32.xlu0 %v370, 16
  %v404 = vpop.permute.xlu0 %403
  %405 = vrot.lane.b32.xlu0 %v371, 16
  %v406 = vpop.permute.xlu0 %405
  %407 = vrot.lane.b32.xlu0 %v372, 16
  %v408 = vpop.permute.xlu0 %407
  %409 = vrot.lane.b32.xlu0 %v373, 16
  %v410 = vpop.permute.xlu0 %409
  %411 = vrot.lane.b32.xlu0 %v374, 16
  %v412 = vpop.permute.xlu0 %411
  %413 = vrot.lane.b32.xlu0 %v375, 16
  %v414 = vpop.permute.xlu0 %413
  %415 = vrot.lane.b32.xlu0 %v376, 16
  %v416 = vpop.permute.xlu0 %415
  %417 = vrot.lane.b32.xlu0 %v377, 16
  %v418 = vpop.permute.xlu0 %417
  %419 = vrot.lane.b32.xlu0 %v378, 16
  %v420 = vpop.permute.xlu0 %419
  %421 = vrot.lane.b32.xlu0 %v379, 16
  %v422 = vpop.permute.xlu0 %421
  %423 = vrot.lane.b32.xlu0 %v380, 16
  %v424 = vpop.permute.xlu0 %423
  %425 = vrot.lane.b32.xlu0 %v381, 16
  %v426 = vpop.permute.xlu0 %425
  %427 = vrot.lane.b32.xlu0 %v382, 16
  %v428 = vpop.permute.xlu0 %427
  %429 = vrot.lane.b32.xlu0 %v383, 16
  %v430 = vpop.permute.xlu0 %429
  %431 = vrot.lane.b32.xlu0 %v384, 16
  %v432 = vpop.permute.xlu0 %431
  %vm449 = vcmask 261248
  %450 = vst.msk [vmem:[#allocation3] sm:$0xff] %vm449, %v402
  %451 = vst.msk [vmem:[#allocation3 + $0x10] sm:$0xff] %vm449, %v404
  %452 = vst.msk [vmem:[#allocation3 + $0x20] sm:$0xff] %vm449, %v406
  %453 = vst.msk [vmem:[#allocation3 + $0x30] sm:$0xff] %vm449, %v408
  %454 = vst.msk [vmem:[#allocation3 + $0x40] sm:$0xff] %vm449, %v410
  %455 = vst.msk [vmem:[#allocation3 + $0x50] sm:$0xff] %vm449, %v412
  %456 = vst.msk [vmem:[#allocation3 + $0x60] sm:$0xff] %vm449, %v414
  %457 = vst.msk [vmem:[#allocation3 + $0x70] sm:$0xff] %vm449, %v416
  %458 = vst.msk [vmem:[#allocation3 + $0x80] sm:$0xff] %vm449, %v418
  %459 = vst.msk [vmem:[#allocation3 + $0x90] sm:$0xff] %vm449, %v420
  %460 = vst.msk [vmem:[#allocation3 + $0xa0] sm:$0xff] %vm449, %v422
  %461 = vst.msk [vmem:[#allocation3 + $0xb0] sm:$0xff] %vm449, %v424
  %462 = vst.msk [vmem:[#allocation3 + $0xc0] sm:$0xff] %vm449, %v426
  %463 = vst.msk [vmem:[#allocation3 + $0xd0] sm:$0xff] %vm449, %v428
  %464 = vst.msk [vmem:[#allocation3 + $0xe0] sm:$0xff] %vm449, %v430
  %465 = vst.msk [vmem:[#allocation3 + $0xf0] sm:$0xff] %vm449, %v432
  %v466 = vld [vmem:[#allocation2 + $0x2] sm:$0xff]
  %v467 = vld [vmem:[#allocation2 + $0x12] sm:$0xff]
  %v468 = vld [vmem:[#allocation2 + $0x22] sm:$0xff]
  %v469 = vld [vmem:[#allocation2 + $0x32] sm:$0xff]
  %v470 = vld [vmem:[#allocation2 + $0x42] sm:$0xff]
  %v471 = vld [vmem:[#allocation2 + $0x52] sm:$0xff]
  %v472 = vld [vmem:[#allocation2 + $0x62] sm:$0xff]
  %v473 = vld [vmem:[#allocation2 + $0x72] sm:$0xff]
  %v474 = vld [vmem:[#allocation2 + $0xa2] sm:$0xff]
  %v475 = vld [vmem:[#allocation2 + $0xb2] sm:$0xff]
  %v476 = vld [vmem:[#allocation2 + $0xc2] sm:$0xff]
  %v477 = vld [vmem:[#allocation2 + $0xd2] sm:$0xff]
  %v478 = vld [vmem:[#allocation2 + $0xe2] sm:$0xff]
  %v479 = vld [vmem:[#allocation2 + $0xf2] sm:$0xff]
  %v480 = vld [vmem:[#allocation2 + $0x102] sm:$0xff]
  %v481 = vld [vmem:[#allocation2 + $0x112] sm:$0xff]
  %498 = vrot.lane.b32.xlu0 %v466, 32
  %v499 = vpop.permute.xlu0 %498
  %500 = vrot.lane.b32.xlu0 %v467, 32
  %v501 = vpop.permute.xlu0 %500
  %502 = vrot.lane.b32.xlu0 %v468, 32
  %v503 = vpop.permute.xlu0 %502
  %504 = vrot.lane.b32.xlu0 %v469, 32
  %v505 = vpop.permute.xlu0 %504
  %506 = vrot.lane.b32.xlu0 %v470, 32
  %v507 = vpop.permute.xlu0 %506
  %508 = vrot.lane.b32.xlu0 %v471, 32
  %v509 = vpop.permute.xlu0 %508
  %510 = vrot.lane.b32.xlu0 %v472, 32
  %v511 = vpop.permute.xlu0 %510
  %512 = vrot.lane.b32.xlu0 %v473, 32
  %v513 = vpop.permute.xlu0 %512
  %514 = vrot.lane.b32.xlu0 %v474, 32
  %v515 = vpop.permute.xlu0 %514
  %516 = vrot.lane.b32.xlu0 %v475, 32
  %v517 = vpop.permute.xlu0 %516
  %518 = vrot.lane.b32.xlu0 %v476, 32
  %v519 = vpop.permute.xlu0 %518
  %520 = vrot.lane.b32.xlu0 %v477, 32
  %v521 = vpop.permute.xlu0 %520
  %522 = vrot.lane.b32.xlu0 %v478, 32
  %v523 = vpop.permute.xlu0 %522
  %524 = vrot.lane.b32.xlu0 %v479, 32
  %v525 = vpop.permute.xlu0 %524
  %526 = vrot.lane.b32.xlu0 %v480, 32
  %v527 = vpop.permute.xlu0 %526
  %528 = vrot.lane.b32.xlu0 %v481, 32
  %v529 = vpop.permute.xlu0 %528
  %vm546 = vcmask 392448
  %547 = vst.msk [vmem:[#allocation3] sm:$0xff] %vm546, %v499
  %548 = vst.msk [vmem:[#allocation3 + $0x10] sm:$0xff] %vm546, %v501
  %549 = vst.msk [vmem:[#allocation3 + $0x20] sm:$0xff] %vm546, %v503
  %550 = vst.msk [vmem:[#allocation3 + $0x30] sm:$0xff] %vm546, %v505
  %551 = vst.msk [vmem:[#allocation3 + $0x40] sm:$0xff] %vm546, %v507
  %552 = vst.msk [vmem:[#allocation3 + $0x50] sm:$0xff] %vm546, %v509
  %553 = vst.msk [vmem:[#allocation3 + $0x60] sm:$0xff] %vm546, %v511
  %554 = vst.msk [vmem:[#allocation3 + $0x70] sm:$0xff] %vm546, %v513
  %555 = vst.msk [vmem:[#allocation3 + $0x80] sm:$0xff] %vm546, %v515
  %556 = vst.msk [vmem:[#allocation3 + $0x90] sm:$0xff] %vm546, %v517
  %557 = vst.msk [vmem:[#allocation3 + $0xa0] sm:$0xff] %vm546, %v519
  %558 = vst.msk [vmem:[#allocation3 + $0xb0] sm:$0xff] %vm546, %v521
  %559 = vst.msk [vmem:[#allocation3 + $0xc0] sm:$0xff] %vm546, %v523
  %560 = vst.msk [vmem:[#allocation3 + $0xd0] sm:$0xff] %vm546, %v525
  %561 = vst.msk [vmem:[#allocation3 + $0xe0] sm:$0xff] %vm546, %v527
  %562 = vst.msk [vmem:[#allocation3 + $0xf0] sm:$0xff] %vm546, %v529
  %v563 = vld [vmem:[%s320] sm:$0xff]
  %v564 = vld [vmem:[%s320 + $0x10] sm:$0xff]
  %v565 = vld [vmem:[%s320 + $0x20] sm:$0xff]
  %v566 = vld [vmem:[%s320 + $0x30] sm:$0xff]
  %v567 = vld [vmem:[%s320 + $0x40] sm:$0xff]
  %v568 = vld [vmem:[%s320 + $0x50] sm:$0xff]
  %v569 = vld [vmem:[%s320 + $0x60] sm:$0xff]
  %v570 = vld [vmem:[%s320 + $0x70] sm:$0xff]
  %v571 = vld [vmem:[%s320 + $0xa0] sm:$0xff]
  %v572 = vld [vmem:[%s320 + $0xb0] sm:$0xff]
  %v573 = vld [vmem:[%s320 + $0xc0] sm:$0xff]
  %v574 = vld [vmem:[%s320 + $0xd0] sm:$0xff]
  %v575 = vld [vmem:[%s320 + $0xe0] sm:$0xff]
  %v576 = vld [vmem:[%s320 + $0xf0] sm:$0xff]
  %v577 = vld [vmem:[%s320 + $0x100] sm:$0xff]
  %v578 = vld [vmem:[%s320 + $0x110] sm:$0xff]
  %595 = vrot.lane.b32.xlu0 %v563, 48
  %v596 = vpop.permute.xlu0 %595
  %597 = vrot.lane.b32.xlu0 %v564, 48
  %v598 = vpop.permute.xlu0 %597
  %599 = vrot.lane.b32.xlu0 %v565, 48
  %v600 = vpop.permute.xlu0 %599
  %601 = vrot.lane.b32.xlu0 %v566, 48
  %v602 = vpop.permute.xlu0 %601
  %603 = vrot.lane.b32.xlu0 %v567, 48
  %v604 = vpop.permute.xlu0 %603
  %605 = vrot.lane.b32.xlu0 %v568, 48
  %v606 = vpop.permute.xlu0 %605
  %607 = vrot.lane.b32.xlu0 %v569, 48
  %v608 = vpop.permute.xlu0 %607
  %609 = vrot.lane.b32.xlu0 %v570, 48
  %v610 = vpop.permute.xlu0 %609
  %611 = vrot.lane.b32.xlu0 %v571, 48
  %v612 = vpop.permute.xlu0 %611
  %613 = vrot.lane.b32.xlu0 %v572, 48
  %v614 = vpop.permute.xlu0 %613
  %615 = vrot.lane.b32.xlu0 %v573, 48
  %v616 = vpop.permute.xlu0 %615
  %617 = vrot.lane.b32.xlu0 %v574, 48
  %v618 = vpop.permute.xlu0 %617
  %619 = vrot.lane.b32.xlu0 %v575, 48
  %v620 = vpop.permute.xlu0 %619
  %621 = vrot.lane.b32.xlu0 %v576, 48
  %v622 = vpop.permute.xlu0 %621
  %623 = vrot.lane.b32.xlu0 %v577, 48
  %v624 = vpop.permute.xlu0 %623
  %625 = vrot.lane.b32.xlu0 %v578, 48
  %v626 = vpop.permute.xlu0 %625
  %vm643 = vcmask 523648
  %644 = vst.msk [vmem:[#allocation3] sm:$0xff] %vm643, %v596
  %645 = vst.msk [vmem:[#allocation3 + $0x10] sm:$0xff] %vm643, %v598
  %646 = vst.msk [vmem:[#allocation3 + $0x20] sm:$0xff] %vm643, %v600
  %647 = vst.msk [vmem:[#allocation3 + $0x30] sm:$0xff] %vm643, %v602
  %648 = vst.msk [vmem:[#allocation3 + $0x40] sm:$0xff] %vm643, %v604
  %649 = vst.msk [vmem:[#allocation3 + $0x50] sm:$0xff] %vm643, %v606
  %650 = vst.msk [vmem:[#allocation3 + $0x60] sm:$0xff] %vm643, %v608
  %651 = vst.msk [vmem:[#allocation3 + $0x70] sm:$0xff] %vm643, %v610
  %652 = vst.msk [vmem:[#allocation3 + $0x80] sm:$0xff] %vm643, %v612
  %653 = vst.msk [vmem:[#allocation3 + $0x90] sm:$0xff] %vm643, %v614
  %654 = vst.msk [vmem:[#allocation3 + $0xa0] sm:$0xff] %vm643, %v616
  %655 = vst.msk [vmem:[#allocation3 + $0xb0] sm:$0xff] %vm643, %v618
  %656 = vst.msk [vmem:[#allocation3 + $0xc0] sm:$0xff] %vm643, %v620
  %657 = vst.msk [vmem:[#allocation3 + $0xd0] sm:$0xff] %vm643, %v622
  %658 = vst.msk [vmem:[#allocation3 + $0xe0] sm:$0xff] %vm643, %v624
  %659 = vst.msk [vmem:[#allocation3 + $0xf0] sm:$0xff] %vm643, %v626
  %v660 = vld [vmem:[%s320 + $0x1] sm:$0xff]
  %v661 = vld [vmem:[%s320 + $0x11] sm:$0xff]
  %v662 = vld [vmem:[%s320 + $0x21] sm:$0xff]
  %v663 = vld [vmem:[%s320 + $0x31] sm:$0xff]
  %v664 = vld [vmem:[%s320 + $0x41] sm:$0xff]
  %v665 = vld [vmem:[%s320 + $0x51] sm:$0xff]
  %v666 = vld [vmem:[%s320 + $0x61] sm:$0xff]
  %v667 = vld [vmem:[%s320 + $0x71] sm:$0xff]
  %v668 = vld [vmem:[%s320 + $0xa1] sm:$0xff]
  %v669 = vld [vmem:[%s320 + $0xb1] sm:$0xff]
  %v670 = vld [vmem:[%s320 + $0xc1] sm:$0xff]
  %v671 = vld [vmem:[%s320 + $0xd1] sm:$0xff]
  %v672 = vld [vmem:[%s320 + $0xe1] sm:$0xff]
  %v673 = vld [vmem:[%s320 + $0xf1] sm:$0xff]
  %v674 = vld [vmem:[%s320 + $0x101] sm:$0xff]
  %v675 = vld [vmem:[%s320 + $0x111] sm:$0xff]
  %692 = vrot.lane.b32.xlu0 %v660, 64
  %v693 = vpop.permute.xlu0 %692
  %694 = vrot.lane.b32.xlu0 %v661, 64
  %v695 = vpop.permute.xlu0 %694
  %696 = vrot.lane.b32.xlu0 %v662, 64
  %v697 = vpop.permute.xlu0 %696
  %698 = vrot.lane.b32.xlu0 %v663, 64
  %v699 = vpop.permute.xlu0 %698
  %700 = vrot.lane.b32.xlu0 %v664, 64
  %v701 = vpop.permute.xlu0 %700
  %702 = vrot.lane.b32.xlu0 %v665, 64
  %v703 = vpop.permute.xlu0 %702
  %704 = vrot.lane.b32.xlu0 %v666, 64
  %v705 = vpop.permute.xlu0 %704
  %706 = vrot.lane.b32.xlu0 %v667, 64
  %v707 = vpop.permute.xlu0 %706
  %708 = vrot.lane.b32.xlu0 %v668, 64
  %v709 = vpop.permute.xlu0 %708
  %710 = vrot.lane.b32.xlu0 %v669, 64
  %v711 = vpop.permute.xlu0 %710
  %712 = vrot.lane.b32.xlu0 %v670, 64
  %v713 = vpop.permute.xlu0 %712
  %714 = vrot.lane.b32.xlu0 %v671, 64
  %v715 = vpop.permute.xlu0 %714
  %716 = vrot.lane.b32.xlu0 %v672, 64
  %v717 = vpop.permute.xlu0 %716
  %718 = vrot.lane.b32.xlu0 %v673, 64
  %v719 = vpop.permute.xlu0 %718
  %720 = vrot.lane.b32.xlu0 %v674, 64
  %v721 = vpop.permute.xlu0 %720
  %722 = vrot.lane.b32.xlu0 %v675, 64
  %v723 = vpop.permute.xlu0 %722
  %vm740 = vcmask 654848
  %741 = vst.msk [vmem:[#allocation3] sm:$0xff] %vm740, %v693
  %742 = vst.msk [vmem:[#allocation3 + $0x10] sm:$0xff] %vm740, %v695
  %743 = vst.msk [vmem:[#allocation3 + $0x20] sm:$0xff] %vm740, %v697
  %744 = vst.msk [vmem:[#allocation3 + $0x30] sm:$0xff] %vm740, %v699
  %745 = vst.msk [vmem:[#allocation3 + $0x40] sm:$0xff] %vm740, %v701
  %746 = vst.msk [vmem:[#allocation3 + $0x50] sm:$0xff] %vm740, %v703
  %747 = vst.msk [vmem:[#allocation3 + $0x60] sm:$0xff] %vm740, %v705
  %748 = vst.msk [vmem:[#allocation3 + $0x70] sm:$0xff] %vm740, %v707
  %749 = vst.msk [vmem:[#allocation3 + $0x80] sm:$0xff] %vm740, %v709
  %750 = vst.msk [vmem:[#allocation3 + $0x90] sm:$0xff] %vm740, %v711
  %751 = vst.msk [vmem:[#allocation3 + $0xa0] sm:$0xff] %vm740, %v713
  %752 = vst.msk [vmem:[#allocation3 + $0xb0] sm:$0xff] %vm740, %v715
  %753 = vst.msk [vmem:[#allocation3 + $0xc0] sm:$0xff] %vm740, %v717
  %754 = vst.msk [vmem:[#allocation3 + $0xd0] sm:$0xff] %vm740, %v719
  %755 = vst.msk [vmem:[#allocation3 + $0xe0] sm:$0xff] %vm740, %v721
  %756 = vst.msk [vmem:[#allocation3 + $0xf0] sm:$0xff] %vm740, %v723
  %v757 = vld [vmem:[%s320 + $0x2] sm:$0xff]
  %v758 = vld [vmem:[%s320 + $0x12] sm:$0xff]
  %v759 = vld [vmem:[%s320 + $0x22] sm:$0xff]
  %v760 = vld [vmem:[%s320 + $0x32] sm:$0xff]
  %v761 = vld [vmem:[%s320 + $0x42] sm:$0xff]
  %v762 = vld [vmem:[%s320 + $0x52] sm:$0xff]
  %v763 = vld [vmem:[%s320 + $0x62] sm:$0xff]
  %v764 = vld [vmem:[%s320 + $0x72] sm:$0xff]
  %v765 = vld [vmem:[%s320 + $0xa2] sm:$0xff]
  %v766 = vld [vmem:[%s320 + $0xb2] sm:$0xff]
  %v767 = vld [vmem:[%s320 + $0xc2] sm:$0xff]
  %v768 = vld [vmem:[%s320 + $0xd2] sm:$0xff]
  %v769 = vld [vmem:[%s320 + $0xe2] sm:$0xff]
  %v770 = vld [vmem:[%s320 + $0xf2] sm:$0xff]
  %v771 = vld [vmem:[%s320 + $0x102] sm:$0xff]
  %v772 = vld [vmem:[%s320 + $0x112] sm:$0xff]
  %789 = vrot.lane.b32.xlu0 %v757, 80
  %v790 = vpop.permute.xlu0 %789
  %791 = vrot.lane.b32.xlu0 %v758, 80
  %v792 = vpop.permute.xlu0 %791
  %793 = vrot.lane.b32.xlu0 %v759, 80
  %v794 = vpop.permute.xlu0 %793
  %795 = vrot.lane.b32.xlu0 %v760, 80
  %v796 = vpop.permute.xlu0 %795
  %797 = vrot.lane.b32.xlu0 %v761, 80
  %v798 = vpop.permute.xlu0 %797
  %799 = vrot.lane.b32.xlu0 %v762, 80
  %v800 = vpop.permute.xlu0 %799
  %801 = vrot.lane.b32.xlu0 %v763, 80
  %v802 = vpop.permute.xlu0 %801
  %803 = vrot.lane.b32.xlu0 %v764, 80
  %v804 = vpop.permute.xlu0 %803
  %805 = vrot.lane.b32.xlu0 %v765, 80
  %v806 = vpop.permute.xlu0 %805
  %807 = vrot.lane.b32.xlu0 %v766, 80
  %v808 = vpop.permute.xlu0 %807
  %809 = vrot.lane.b32.xlu0 %v767, 80
  %v810 = vpop.permute.xlu0 %809
  %811 = vrot.lane.b32.xlu0 %v768, 80
  %v812 = vpop.permute.xlu0 %811
  %813 = vrot.lane.b32.xlu0 %v769, 80
  %v814 = vpop.permute.xlu0 %813
  %815 = vrot.lane.b32.xlu0 %v770, 80
  %v816 = vpop.permute.xlu0 %815
  %817 = vrot.lane.b32.xlu0 %v771, 80
  %v818 = vpop.permute.xlu0 %817
  %819 = vrot.lane.b32.xlu0 %v772, 80
  %v820 = vpop.permute.xlu0 %819
  %vm837 = vcmask 786048
  %838 = vst.msk [vmem:[#allocation3] sm:$0xff] %vm837, %v790
  %839 = vst.msk [vmem:[#allocation3 + $0x10] sm:$0xff] %vm837, %v792
  %840 = vst.msk [vmem:[#allocation3 + $0x20] sm:$0xff] %vm837, %v794
  %841 = vst.msk [vmem:[#allocation3 + $0x30] sm:$0xff] %vm837, %v796
  %842 = vst.msk [vmem:[#allocation3 + $0x40] sm:$0xff] %vm837, %v798
  %843 = vst.msk [vmem:[#allocation3 + $0x50] sm:$0xff] %vm837, %v800
  %844 = vst.msk [vmem:[#allocation3 + $0x60] sm:$0xff] %vm837, %v802
  %845 = vst.msk [vmem:[#allocation3 + $0x70] sm:$0xff] %vm837, %v804
  %846 = vst.msk [vmem:[#allocation3 + $0x80] sm:$0xff] %vm837, %v806
  %847 = vst.msk [vmem:[#allocation3 + $0x90] sm:$0xff] %vm837, %v808
  %848 = vst.msk [vmem:[#allocation3 + $0xa0] sm:$0xff] %vm837, %v810
  %849 = vst.msk [vmem:[#allocation3 + $0xb0] sm:$0xff] %vm837, %v812
  %850 = vst.msk [vmem:[#allocation3 + $0xc0] sm:$0xff] %vm837, %v814
  %851 = vst.msk [vmem:[#allocation3 + $0xd0] sm:$0xff] %vm837, %v816
  %852 = vst.msk [vmem:[#allocation3 + $0xe0] sm:$0xff] %vm837, %v818
  %853 = vst.msk [vmem:[#allocation3 + $0xf0] sm:$0xff] %vm837, %v820
  %s854 = scalar_lea.vmem [#allocation2], 32
  %v855 = vld [vmem:[%s854] sm:$0xff]
  %v856 = vld [vmem:[%s854 + $0x10] sm:$0xff]
  %v857 = vld [vmem:[%s854 + $0x20] sm:$0xff]
  %v858 = vld [vmem:[%s854 + $0x30] sm:$0xff]
  %v859 = vld [vmem:[%s854 + $0x40] sm:$0xff]
  %v860 = vld [vmem:[%s854 + $0x50] sm:$0xff]
  %v861 = vld [vmem:[%s854 + $0x60] sm:$0xff]
  %v862 = vld [vmem:[%s854 + $0x70] sm:$0xff]
  %v863 = vld [vmem:[%s854 + $0xa0] sm:$0xff]
  %v864 = vld [vmem:[%s854 + $0xb0] sm:$0xff]
  %v865 = vld [vmem:[%s854 + $0xc0] sm:$0xff]
  %v866 = vld [vmem:[%s854 + $0xd0] sm:$0xff]
  %v867 = vld [vmem:[%s854 + $0xe0] sm:$0xff]
  %v868 = vld [vmem:[%s854 + $0xf0] sm:$0xff]
  %v869 = vld [vmem:[%s854 + $0x100] sm:$0xff]
  %v870 = vld [vmem:[%s854 + $0x110] sm:$0xff]
  %887 = vrot.lane.b32.xlu0 %v855, 96
  %v888 = vpop.permute.xlu0 %887
  %889 = vrot.lane.b32.xlu0 %v856, 96
  %v890 = vpop.permute.xlu0 %889
  %891 = vrot.lane.b32.xlu0 %v857, 96
  %v892 = vpop.permute.xlu0 %891
  %893 = vrot.lane.b32.xlu0 %v858, 96
  %v894 = vpop.permute.xlu0 %893
  %895 = vrot.lane.b32.xlu0 %v859, 96
  %v896 = vpop.permute.xlu0 %895
  %897 = vrot.lane.b32.xlu0 %v860, 96
  %v898 = vpop.permute.xlu0 %897
  %899 = vrot.lane.b32.xlu0 %v861, 96
  %v900 = vpop.permute.xlu0 %899
  %901 = vrot.lane.b32.xlu0 %v862, 96
  %v902 = vpop.permute.xlu0 %901
  %903 = vrot.lane.b32.xlu0 %v863, 96
  %v904 = vpop.permute.xlu0 %903
  %905 = vrot.lane.b32.xlu0 %v864, 96
  %v906 = vpop.permute.xlu0 %905
  %907 = vrot.lane.b32.xlu0 %v865, 96
  %v908 = vpop.permute.xlu0 %907
  %909 = vrot.lane.b32.xlu0 %v866, 96
  %v910 = vpop.permute.xlu0 %909
  %911 = vrot.lane.b32.xlu0 %v867, 96
  %v912 = vpop.permute.xlu0 %911
  %913 = vrot.lane.b32.xlu0 %v868, 96
  %v914 = vpop.permute.xlu0 %913
  %915 = vrot.lane.b32.xlu0 %v869, 96
  %v916 = vpop.permute.xlu0 %915
  %917 = vrot.lane.b32.xlu0 %v870, 96
  %v918 = vpop.permute.xlu0 %917
  %vm935 = vcmask 917248
  %936 = vst.msk [vmem:[#allocation3] sm:$0xff] %vm935, %v888
  %937 = vst.msk [vmem:[#allocation3 + $0x10] sm:$0xff] %vm935, %v890
  %938 = vst.msk [vmem:[#allocation3 + $0x20] sm:$0xff] %vm935, %v892
  %939 = vst.msk [vmem:[#allocation3 + $0x30] sm:$0xff] %vm935, %v894
  %940 = vst.msk [vmem:[#allocation3 + $0x40] sm:$0xff] %vm935, %v896
  %941 = vst.msk [vmem:[#allocation3 + $0x50] sm:$0xff] %vm935, %v898
  %942 = vst.msk [vmem:[#allocation3 + $0x60] sm:$0xff] %vm935, %v900
  %943 = vst.msk [vmem:[#allocation3 + $0x70] sm:$0xff] %vm935, %v902
  %944 = vst.msk [vmem:[#allocation3 + $0x80] sm:$0xff] %vm935, %v904
  %945 = vst.msk [vmem:[#allocation3 + $0x90] sm:$0xff] %vm935, %v906
  %946 = vst.msk [vmem:[#allocation3 + $0xa0] sm:$0xff] %vm935, %v908
  %947 = vst.msk [vmem:[#allocation3 + $0xb0] sm:$0xff] %vm935, %v910
  %948 = vst.msk [vmem:[#allocation3 + $0xc0] sm:$0xff] %vm935, %v912
  %949 = vst.msk [vmem:[#allocation3 + $0xd0] sm:$0xff] %vm935, %v914
  %950 = vst.msk [vmem:[#allocation3 + $0xe0] sm:$0xff] %vm935, %v916
  %951 = vst.msk [vmem:[#allocation3 + $0xf0] sm:$0xff] %vm935, %v918
  %v952 = vld [vmem:[%s854 + $0x1] sm:$0xff]
  %v953 = vld [vmem:[%s854 + $0x11] sm:$0xff]
  %v954 = vld [vmem:[%s854 + $0x21] sm:$0xff]
  %v955 = vld [vmem:[%s854 + $0x31] sm:$0xff]
  %v956 = vld [vmem:[%s854 + $0x41] sm:$0xff]
  %v957 = vld [vmem:[%s854 + $0x51] sm:$0xff]
  %v958 = vld [vmem:[%s854 + $0x61] sm:$0xff]
  %v959 = vld [vmem:[%s854 + $0x71] sm:$0xff]
  %v960 = vld [vmem:[%s854 + $0xa1] sm:$0xff]
  %v961 = vld [vmem:[%s854 + $0xb1] sm:$0xff]
  %v962 = vld [vmem:[%s854 + $0xc1] sm:$0xff]
  %v963 = vld [vmem:[%s854 + $0xd1] sm:$0xff]
  %v964 = vld [vmem:[%s854 + $0xe1] sm:$0xff]
  %v965 = vld [vmem:[%s854 + $0xf1] sm:$0xff]
  %v966 = vld [vmem:[%s854 + $0x101] sm:$0xff]
  %v967 = vld [vmem:[%s854 + $0x111] sm:$0xff]
  %984 = vrot.lane.b32.xlu0 %v952, 112
  %v985 = vpop.permute.xlu0 %984
  %986 = vrot.lane.b32.xlu0 %v953, 112
  %v987 = vpop.permute.xlu0 %986
  %988 = vrot.lane.b32.xlu0 %v954, 112
  %v989 = vpop.permute.xlu0 %988
  %990 = vrot.lane.b32.xlu0 %v955, 112
  %v991 = vpop.permute.xlu0 %990
  %992 = vrot.lane.b32.xlu0 %v956, 112
  %v993 = vpop.permute.xlu0 %992
  %994 = vrot.lane.b32.xlu0 %v957, 112
  %v995 = vpop.permute.xlu0 %994
  %996 = vrot.lane.b32.xlu0 %v958, 112
  %v997 = vpop.permute.xlu0 %996
  %998 = vrot.lane.b32.xlu0 %v959, 112
  %v999 = vpop.permute.xlu0 %998
  %1000 = vrot.lane.b32.xlu0 %v960, 112
  %v1001 = vpop.permute.xlu0 %1000
  %1002 = vrot.lane.b32.xlu0 %v961, 112
  %v1003 = vpop.permute.xlu0 %1002
  %1004 = vrot.lane.b32.xlu0 %v962, 112
  %v1005 = vpop.permute.xlu0 %1004
  %1006 = vrot.lane.b32.xlu0 %v963, 112
  %v1007 = vpop.permute.xlu0 %1006
  %1008 = vrot.lane.b32.xlu0 %v964, 112
  %v1009 = vpop.permute.xlu0 %1008
  %1010 = vrot.lane.b32.xlu0 %v965, 112
  %v1011 = vpop.permute.xlu0 %1010
  %1012 = vrot.lane.b32.xlu0 %v966, 112
  %v1013 = vpop.permute.xlu0 %1012
  %1014 = vrot.lane.b32.xlu0 %v967, 112
  %v1015 = vpop.permute.xlu0 %1014
  %vm1032 = vcmask 1048448
  %1033 = vst.msk [vmem:[#allocation3] sm:$0xff] %vm1032, %v985
  %1034 = vst.msk [vmem:[#allocation3 + $0x10] sm:$0xff] %vm1032, %v987
  %1035 = vst.msk [vmem:[#allocation3 + $0x20] sm:$0xff] %vm1032, %v989
  %1036 = vst.msk [vmem:[#allocation3 + $0x30] sm:$0xff] %vm1032, %v991
  %1037 = vst.msk [vmem:[#allocation3 + $0x40] sm:$0xff] %vm1032, %v993
  %1038 = vst.msk [vmem:[#allocation3 + $0x50] sm:$0xff] %vm1032, %v995
  %1039 = vst.msk [vmem:[#allocation3 + $0x60] sm:$0xff] %vm1032, %v997
  %1040 = vst.msk [vmem:[#allocation3 + $0x70] sm:$0xff] %vm1032, %v999
  %1041 = vst.msk [vmem:[#allocation3 + $0x80] sm:$0xff] %vm1032, %v1001
  %1042 = vst.msk [vmem:[#allocation3 + $0x90] sm:$0xff] %vm1032, %v1003
  %1043 = vst.msk [vmem:[#allocation3 + $0xa0] sm:$0xff] %vm1032, %v1005
  %1044 = vst.msk [vmem:[#allocation3 + $0xb0] sm:$0xff] %vm1032, %v1007
  %1045 = vst.msk [vmem:[#allocation3 + $0xc0] sm:$0xff] %vm1032, %v1009
  %1046 = vst.msk [vmem:[#allocation3 + $0xd0] sm:$0xff] %vm1032, %v1011
  %1047 = vst.msk [vmem:[#allocation3 + $0xe0] sm:$0xff] %vm1032, %v1013
  %1048 = vst.msk [vmem:[#allocation3 + $0xf0] sm:$0xff] %vm1032, %v1015
  %v1049 = vld [vmem:[%s854 + $0x2] sm:$0xff]
  %v1050 = vld [vmem:[%s854 + $0x12] sm:$0xff]
  %v1051 = vld [vmem:[%s854 + $0x22] sm:$0xff]
  %v1052 = vld [vmem:[%s854 + $0x32] sm:$0xff]
  %v1053 = vld [vmem:[%s854 + $0x42] sm:$0xff]
  %v1054 = vld [vmem:[%s854 + $0x52] sm:$0xff]
  %v1055 = vld [vmem:[%s854 + $0x62] sm:$0xff]
  %v1056 = vld [vmem:[%s854 + $0x72] sm:$0xff]
  %v1057 = vld [vmem:[%s854 + $0xa2] sm:$0xff]
  %v1058 = vld [vmem:[%s854 + $0xb2] sm:$0xff]
  %v1059 = vld [vmem:[%s854 + $0xc2] sm:$0xff]
  %v1060 = vld [vmem:[%s854 + $0xd2] sm:$0xff]
  %v1061 = vld [vmem:[%s854 + $0xe2] sm:$0xff]
  %v1062 = vld [vmem:[%s854 + $0xf2] sm:$0xff]
  %v1063 = vld [vmem:[%s854 + $0x102] sm:$0xff]
  %v1064 = vld [vmem:[%s854 + $0x112] sm:$0xff]
  %1065 = vst.msk [vmem:[#allocation3 + $0x8] sm:$0xff] %vm268, %v1049
  %1066 = vst.msk [vmem:[#allocation3 + $0x18] sm:$0xff] %vm268, %v1050
  %1067 = vst.msk [vmem:[#allocation3 + $0x28] sm:$0xff] %vm268, %v1051
  %1068 = vst.msk [vmem:[#allocation3 + $0x38] sm:$0xff] %vm268, %v1052
  %1069 = vst.msk [vmem:[#allocation3 + $0x48] sm:$0xff] %vm268, %v1053
  %1070 = vst.msk [vmem:[#allocation3 + $0x58] sm:$0xff] %vm268, %v1054
  %1071 = vst.msk [vmem:[#allocation3 + $0x68] sm:$0xff] %vm268, %v1055
  %1072 = vst.msk [vmem:[#allocation3 + $0x78] sm:$0xff] %vm268, %v1056
  %1073 = vst.msk [vmem:[#allocation3 + $0x88] sm:$0xff] %vm268, %v1057
  %1074 = vst.msk [vmem:[#allocation3 + $0x98] sm:$0xff] %vm268, %v1058
  %1075 = vst.msk [vmem:[#allocation3 + $0xa8] sm:$0xff] %vm268, %v1059
  %1076 = vst.msk [vmem:[#allocation3 + $0xb8] sm:$0xff] %vm268, %v1060
  %1077 = vst.msk [vmem:[#allocation3 + $0xc8] sm:$0xff] %vm268, %v1061
  %1078 = vst.msk [vmem:[#allocation3 + $0xd8] sm:$0xff] %vm268, %v1062
  %1079 = vst.msk [vmem:[#allocation3 + $0xe8] sm:$0xff] %vm268, %v1063
  %1080 = vst.msk [vmem:[#allocation3 + $0xf8] sm:$0xff] %vm268, %v1064
  %v1081 = vld [vmem:[#allocation3] sm:$0xff]
  %v1082 = vld [vmem:[#allocation3 + $0x8] sm:$0xff]
  %v1083 = vld [vmem:[#allocation3 + $0x10] sm:$0xff]
  %v1084 = vld [vmem:[#allocation3 + $0x18] sm:$0xff]
  %v1085 = vld [vmem:[#allocation3 + $0x20] sm:$0xff]
  %v1086 = vld [vmem:[#allocation3 + $0x28] sm:$0xff]
  %v1087 = vld [vmem:[#allocation3 + $0x30] sm:$0xff]
  %v1088 = vld [vmem:[#allocation3 + $0x38] sm:$0xff]
  %v1089 = vld [vmem:[#allocation3 + $0x40] sm:$0xff]
  %v1090 = vld [vmem:[#allocation3 + $0x48] sm:$0xff]
  %v1091 = vld [vmem:[#allocation3 + $0x50] sm:$0xff]
  %v1092 = vld [vmem:[#allocation3 + $0x58] sm:$0xff]
  %v1093 = vld [vmem:[#allocation3 + $0x60] sm:$0xff]
  %v1094 = vld [vmem:[#allocation3 + $0x68] sm:$0xff]
  %v1095 = vld [vmem:[#allocation3 + $0x70] sm:$0xff]
  %v1096 = vld [vmem:[#allocation3 + $0x78] sm:$0xff]
  %v1097 = vld [vmem:[#allocation3 + $0x80] sm:$0xff]
  %v1098 = vld [vmem:[#allocation3 + $0x88] sm:$0xff]
  %v1099 = vld [vmem:[#allocation3 + $0x90] sm:$0xff]
  %v1100 = vld [vmem:[#allocation3 + $0x98] sm:$0xff]
  %v1101 = vld [vmem:[#allocation3 + $0xa0] sm:$0xff]
  %v1102 = vld [vmem:[#allocation3 + $0xa8] sm:$0xff]
  %v1103 = vld [vmem:[#allocation3 + $0xb0] sm:$0xff]
  %v1104 = vld [vmem:[#allocation3 + $0xb8] sm:$0xff]
  %v1105 = vld [vmem:[#allocation3 + $0xc0] sm:$0xff]
  %v1106 = vld [vmem:[#allocation3 + $0xc8] sm:$0xff]
  %v1107 = vld [vmem:[#allocation3 + $0xd0] sm:$0xff]
  %v1108 = vld [vmem:[#allocation3 + $0xd8] sm:$0xff]
  %v1109 = vld [vmem:[#allocation3 + $0xe0] sm:$0xff]
  %v1110 = vld [vmem:[#allocation3 + $0xe8] sm:$0xff]
  %v1111 = vld [vmem:[#allocation3 + $0xf0] sm:$0xff]
  %v1112 = vld [vmem:[#allocation3 + $0xf8] sm:$0xff]
  %v1113 = vld [vmem:[%s3] sm:$0xff]
  %v1114 = vld [vmem:[%s3 + $0x8] sm:$0xff]
  %v1115 = vld [vmem:[%s3 + $0x10] sm:$0xff]
  %v1116 = vld [vmem:[%s3 + $0x18] sm:$0xff]
  %v1117 = vld [vmem:[%s3 + $0x20] sm:$0xff]
  %v1118 = vld [vmem:[%s3 + $0x28] sm:$0xff]
  %v1119 = vld [vmem:[%s3 + $0x30] sm:$0xff]
  %v1120 = vld [vmem:[%s3 + $0x38] sm:$0xff]
  %v1121 = vld [vmem:[%s3 + $0x40] sm:$0xff]
  %v1122 = vld [vmem:[%s3 + $0x48] sm:$0xff]
  %v1123 = vld [vmem:[%s3 + $0x50] sm:$0xff]
  %v1124 = vld [vmem:[%s3 + $0x58] sm:$0xff]
  %v1125 = vld [vmem:[%s3 + $0x60] sm:$0xff]
  %v1126 = vld [vmem:[%s3 + $0x68] sm:$0xff]
  %v1127 = vld [vmem:[%s3 + $0x70] sm:$0xff]
  %v1128 = vld [vmem:[%s3 + $0x78] sm:$0xff]
  %v1129 = vld [vmem:[%s3 + $0x80] sm:$0xff]
  %v1130 = vld [vmem:[%s3 + $0x88] sm:$0xff]
  %v1131 = vld [vmem:[%s4] sm:$0x1]
  %v1133 = vlaneseq
  %v1134 = vshrl.u32 %v1133, 7
  %v1135 = vsub.s32 0, %v1134
  %v1136 = vrot.slane %v1131, %v1135
  %v1139 = vsel %vm268, %v1082, 0
  %v1142 = vsel %vm268, %v1084, 0
  %v1145 = vsel %vm268, %v1086, 0
  %v1148 = vsel %vm268, %v1088, 0
  %v1151 = vsel %vm268, %v1090, 0
  %v1154 = vsel %vm268, %v1092, 0
  %v1157 = vsel %vm268, %v1094, 0
  %v1160 = vsel %vm268, %v1096, 0
  %v1163 = vsel %vm268, %v1098, 0
  %v1166 = vsel %vm268, %v1100, 0
  %v1169 = vsel %vm268, %v1102, 0
  %v1172 = vsel %vm268, %v1104, 0
  %v1175 = vsel %vm268, %v1106, 0
  %v1178 = vsel %vm268, %v1108, 0
  %v1181 = vsel %vm268, %v1110, 0
  %v1184 = vsel %vm268, %v1112, 0
  %1186 = vmatprep.subr.mxu0 0.0
  %1187 = vmatpush1.msra.mxu0 %v1128
  %1188 = vmatprep.subr.mxu0 0.0
  %1189 = vmatpush1.msra.mxu0 %v1127
  %1190 = vmatprep.subr.mxu0 0.0
  %1191 = vmatpush1.msra.mxu0 %v1126
  %1192 = vmatprep.subr.mxu0 0.0
  %1193 = vmatpush1.msra.mxu0 %v1125
  %1194 = vmatprep.subr.mxu0 0.0
  %1195 = vmatpush1.msra.mxu0 %v1124
  %1196 = vmatprep.subr.mxu0 0.0
  %1197 = vmatpush1.msra.mxu0 %v1123
  %1198 = vmatprep.subr.mxu0 0.0
  %1199 = vmatpush1.msra.mxu0 %v1122
  %1200 = vmatprep.subr.mxu0 0.0
  %1201 = vmatpush1.msra.mxu0 %v1121
  %1202 = vmatprep.subr.mxu0 0.0
  %1203 = vmatpush1.msra.mxu0 %v1120
  %1204 = vmatprep.subr.mxu0 0.0
  %1205 = vmatpush1.msra.mxu0 %v1119
  %1206 = vmatprep.subr.mxu0 0.0
  %1207 = vmatpush1.msra.mxu0 %v1118
  %1208 = vmatprep.subr.mxu0 0.0
  %1209 = vmatpush1.msra.mxu0 %v1117
  %1210 = vmatprep.subr.mxu0 0.0
  %1211 = vmatpush1.msra.mxu0 %v1116
  %1212 = vmatprep.subr.mxu0 0.0
  %1213 = vmatpush1.msra.mxu0 %v1115
  %1214 = vmatprep.subr.mxu0 0.0
  %1215 = vmatpush1.msra.mxu0 %v1114
  %1216 = vmatprep.subr.mxu0 0.0
  %1217 = vmatpush1.msra.mxu0 %v1113
  %1218 = vmatprep.subr.mxu0 0.0
  %1219 = vmatpush2.msra.mxu0 0.0
  %1220 = vmatprep.subr.mxu0 0.0
  %1221 = vmatpush2.msra.mxu0 0.0
  %1222 = vmatprep.subr.mxu0 0.0
  %1223 = vmatpush2.msra.mxu0 0.0
  %1224 = vmatprep.subr.mxu0 0.0
  %1225 = vmatpush2.msra.mxu0 0.0
  %1226 = vmatprep.subr.mxu0 0.0
  %1227 = vmatpush2.msra.mxu0 0.0
  %1228 = vmatprep.subr.mxu0 0.0
  %1229 = vmatpush2.msra.mxu0 0.0
  %1230 = vmatprep.subr.mxu0 0.0
  %1231 = vmatpush2.msra.mxu0 0.0
  %1232 = vmatprep.subr.mxu0 0.0
  %1233 = vmatpush2.msra.mxu0 0.0
  %1234 = vmatprep.subr.mxu0 0.0
  %1235 = vmatpush2.msra.mxu0 0.0
  %1236 = vmatprep.subr.mxu0 0.0
  %1237 = vmatpush2.msra.mxu0 0.0
  %1238 = vmatprep.subr.mxu0 0.0
  %1239 = vmatpush2.msra.mxu0 0.0
  %1240 = vmatprep.subr.mxu0 0.0
  %1241 = vmatpush2.msra.mxu0 0.0
  %1242 = vmatprep.subr.mxu0 0.0
  %1243 = vmatpush2.msra.mxu0 0.0
  %1244 = vmatprep.subr.mxu0 0.0
  %1245 = vmatpush2.msra.mxu0 0.0
  %1246 = vmatprep.subr.mxu0 0.0
  %1247 = vmatpush2.msra.mxu0 %v1130
  %1248 = vmatprep.subr.mxu0 0.0
  %1249 = vmatpush2.msra.mxu0 %v1129
  %1250 = vmatprep.mubr.f32.mxu0 %v1139
  %1251 = vmatmul.mubr.f32.gmra.mxu0 %v1081
  %v1252 = vpop.f32.mrf.mxu0
  %v1253 = vadd.f32 %v1136, %v1252
  %v1254 = vpop.f32.mrf.mxu0
  %1255 = vmatprep.mubr.f32.mxu0 %v1142
  %1256 = vmatmul.mubr.f32.gmra.mxu0 %v1083
  %v1257 = vpop.f32.mrf.mxu0
  %v1258 = vadd.f32 %v1136, %v1257
  %v1259 = vpop.f32.mrf.mxu0
  %1260 = vmatprep.mubr.f32.mxu0 %v1145
  %1261 = vmatmul.mubr.f32.gmra.mxu0 %v1085
  %v1262 = vpop.f32.mrf.mxu0
  %v1263 = vadd.f32 %v1136, %v1262
  %v1264 = vpop.f32.mrf.mxu0
  %1265 = vmatprep.mubr.f32.mxu0 %v1148
  %1266 = vmatmul.mubr.f32.gmra.mxu0 %v1087
  %v1267 = vpop.f32.mrf.mxu0
  %v1268 = vadd.f32 %v1136, %v1267
  %v1269 = vpop.f32.mrf.mxu0
  %1270 = vmatprep.mubr.f32.mxu0 %v1151
  %1271 = vmatmul.mubr.f32.gmra.mxu0 %v1089
  %v1272 = vpop.f32.mrf.mxu0
  %v1273 = vadd.f32 %v1136, %v1272
  %v1274 = vpop.f32.mrf.mxu0
  %1275 = vmatprep.mubr.f32.mxu0 %v1154
  %1276 = vmatmul.mubr.f32.gmra.mxu0 %v1091
  %v1277 = vpop.f32.mrf.mxu0
  %v1278 = vadd.f32 %v1136, %v1277
  %v1279 = vpop.f32.mrf.mxu0
  %1280 = vmatprep.mubr.f32.mxu0 %v1157
  %1281 = vmatmul.mubr.f32.gmra.mxu0 %v1093
  %v1282 = vpop.f32.mrf.mxu0
  %v1283 = vadd.f32 %v1136, %v1282
  %v1284 = vpop.f32.mrf.mxu0
  %1285 = vmatprep.mubr.f32.mxu0 %v1160
  %1286 = vmatmul.mubr.f32.gmra.mxu0 %v1095
  %v1287 = vpop.f32.mrf.mxu0
  %v1288 = vadd.f32 %v1136, %v1287
  %v1289 = vpop.f32.mrf.mxu0
  %1290 = vmatprep.mubr.f32.mxu0 %v1163
  %1291 = vmatmul.mubr.f32.gmra.mxu0 %v1097
  %v1292 = vpop.f32.mrf.mxu0
  %v1293 = vadd.f32 %v1136, %v1292
  %v1294 = vpop.f32.mrf.mxu0
  %1295 = vmatprep.mubr.f32.mxu0 %v1166
  %1296 = vmatmul.mubr.f32.gmra.mxu0 %v1099
  %v1297 = vpop.f32.mrf.mxu0
  %v1298 = vadd.f32 %v1136, %v1297
  %v1299 = vpop.f32.mrf.mxu0
  %1300 = vmatprep.mubr.f32.mxu0 %v1169
  %1301 = vmatmul.mubr.f32.gmra.mxu0 %v1101
  %v1302 = vpop.f32.mrf.mxu0
  %v1303 = vadd.f32 %v1136, %v1302
  %v1304 = vpop.f32.mrf.mxu0
  %1305 = vmatprep.mubr.f32.mxu0 %v1172
  %1306 = vmatmul.mubr.f32.gmra.mxu0 %v1103
  %v1307 = vpop.f32.mrf.mxu0
  %v1308 = vadd.f32 %v1136, %v1307
  %v1309 = vpop.f32.mrf.mxu0
  %1310 = vmatprep.mubr.f32.mxu0 %v1175
  %1311 = vmatmul.mubr.f32.gmra.mxu0 %v1105
  %v1312 = vpop.f32.mrf.mxu0
  %v1313 = vadd.f32 %v1136, %v1312
  %v1314 = vpop.f32.mrf.mxu0
  %1315 = vmatprep.mubr.f32.mxu0 %v1178
  %1316 = vmatmul.mubr.f32.gmra.mxu0 %v1107
  %v1317 = vpop.f32.mrf.mxu0
  %v1318 = vadd.f32 %v1136, %v1317
  %v1319 = vpop.f32.mrf.mxu0
  %1320 = vmatprep.mubr.f32.mxu0 %v1181
  %1321 = vmatmul.mubr.f32.gmra.mxu0 %v1109
  %v1322 = vpop.f32.mrf.mxu0
  %v1323 = vadd.f32 %v1136, %v1322
  %v1324 = vpop.f32.mrf.mxu0
  %1325 = vmatprep.mubr.f32.mxu0 %v1184
  %1326 = vmatmul.mubr.f32.gmra.mxu0 %v1111
  %v1327 = vpop.f32.mrf.mxu0
  %v1328 = vadd.f32 %v1136, %v1327
  %v1329 = vpop.f32.mrf.mxu0
  %1330 = vdwg.mxu0
  %v1331 = vtanh.pop %v1253
  %v1332 = vtanh.pop %v1258
  %v1333 = vtanh.pop %v1263
  %v1334 = vtanh.pop %v1268
  %v1335 = vtanh.pop %v1273
  %v1336 = vtanh.pop %v1278
  %v1337 = vtanh.pop %v1283
  %v1338 = vtanh.pop %v1288
  %v1339 = vtanh.pop %v1293
  %v1340 = vtanh.pop %v1298
  %v1341 = vtanh.pop %v1303
  %v1342 = vtanh.pop %v1308
  %v1343 = vtanh.pop %v1313
  %v1344 = vtanh.pop %v1318
  %v1345 = vtanh.pop %v1323
  %v1346 = vtanh.pop %v1328
  %v1347 = vld [vmem:[%s5] sm:$0xff]
  %v1348 = vld [vmem:[%s5 + $0x8] sm:$0xff]
  %v1349 = vld [vmem:[%s5 + $0x10] sm:$0xff]
  %v1350 = vld [vmem:[%s5 + $0x18] sm:$0xff]
  %v1351 = vld [vmem:[%s6] sm:$0xff]
  %v1352 = vld [vmem:[%s6 + $0x8] sm:$0xff]
  %v1353 = vld [vmem:[%s6 + $0x10] sm:$0xff]
  %v1354 = vld [vmem:[%s6 + $0x18] sm:$0xff]
  %1356 = vset.pattern.permute.xlu0 0
  %1357 = vperm.xlu0 %1356, %v1351
  %v1358 = vpop.permute.xlu0 %1357
  %1361 = vset.pattern.permute.xlu0 0
  %1362 = vperm.xlu0 %1361, %v1352
  %v1363 = vpop.permute.xlu0 %1362
  %1366 = vset.pattern.permute.xlu0 0
  %1367 = vperm.xlu0 %1366, %v1353
  %v1368 = vpop.permute.xlu0 %1367
  %1371 = vset.pattern.permute.xlu0 0
  %1372 = vperm.xlu0 %1371, %v1354
  %v1373 = vpop.permute.xlu0 %1372
  %vm1375 = vcmask 261120
  %v1377 = vsel %vm1375, %v1347, 0
  %v1380 = vsel %vm1375, %v1348, 0
  %v1383 = vsel %vm1375, %v1349, 0
  %v1386 = vsel %vm1375, %v1350, 0
  %v1389 = vsel %vm1375, %v1331, 0
  %v1392 = vsel %vm1375, %v1332, 0
  %v1395 = vsel %vm1375, %v1333, 0
  %v1398 = vsel %vm1375, %v1334, 0
  %v1401 = vsel %vm1375, %v1335, 0
  %v1404 = vsel %vm1375, %v1336, 0
  %v1407 = vsel %vm1375, %v1337, 0
  %v1410 = vsel %vm1375, %v1338, 0
  %v1413 = vsel %vm1375, %v1339, 0
  %v1416 = vsel %vm1375, %v1340, 0
  %v1419 = vsel %vm1375, %v1341, 0
  %v1422 = vsel %vm1375, %v1342, 0
  %v1425 = vsel %vm1375, %v1343, 0
  %v1428 = vsel %vm1375, %v1344, 0
  %v1431 = vsel %vm1375, %v1345, 0
  %v1434 = vsel %vm1375, %v1346, 0
  %1436 = vmatprep.subr.mxu0 0.0
  %1437 = vmatpush1.xpose.msra.mxu0 %v1434
  %1438 = vmatprep.subr.mxu0 0.0
  %1439 = vmatpush1.xpose.msra.mxu0 %v1431
  %1440 = vmatprep.subr.mxu0 0.0
  %1441 = vmatpush1.xpose.msra.mxu0 %v1428
  %1442 = vmatprep.subr.mxu0 0.0
  %1443 = vmatpush1.xpose.msra.mxu0 %v1425
  %1444 = vmatprep.subr.mxu0 0.0
  %1445 = vmatpush1.xpose.msra.mxu0 %v1422
  %1446 = vmatprep.subr.mxu0 0.0
  %1447 = vmatpush1.xpose.msra.mxu0 %v1419
  %1448 = vmatprep.subr.mxu0 0.0
  %1449 = vmatpush1.xpose.msra.mxu0 %v1416
  %1450 = vmatprep.subr.mxu0 0.0
  %1451 = vmatpush1.xpose.msra.mxu0 %v1413
  %1452 = vmatprep.subr.mxu0 0.0
  %1453 = vmatpush1.xpose.msra.mxu0 %v1410
  %1454 = vmatprep.subr.mxu0 0.0
  %1455 = vmatpush1.xpose.msra.mxu0 %v1407
  %1456 = vmatprep.subr.mxu0 0.0
  %1457 = vmatpush1.xpose.msra.mxu0 %v1404
  %1458 = vmatprep.subr.mxu0 0.0
  %1459 = vmatpush1.xpose.msra.mxu0 %v1401
  %1460 = vmatprep.subr.mxu0 0.0
  %1461 = vmatpush1.xpose.msra.mxu0 %v1398
  %1462 = vmatprep.subr.mxu0 0.0
  %1463 = vmatpush1.xpose.msra.mxu0 %v1395
  %1464 = vmatprep.subr.mxu0 0.0
  %1465 = vmatpush1.xpose.msra.mxu0 %v1392
  %1466 = vmatprep.subr.mxu0 0.0
  %1467 = vmatpush1.xpose.msra.mxu0 %v1389
  %1468 = vmatprep.subr.mxu0 0.0
  %1469 = vmatpush2.xpose.msra.mxu0 0.0
  %1470 = vmatprep.subr.mxu0 0.0
  %1471 = vmatpush2.xpose.msra.mxu0 0.0
  %1472 = vmatprep.subr.mxu0 0.0
  %1473 = vmatpush2.xpose.msra.mxu0 0.0
  %1474 = vmatprep.subr.mxu0 0.0
  %1475 = vmatpush2.xpose.msra.mxu0 0.0
  %1476 = vmatprep.subr.mxu0 0.0
  %1477 = vmatpush2.xpose.msra.mxu0 0.0
  %1478 = vmatprep.subr.mxu0 0.0
  %1479 = vmatpush2.xpose.msra.mxu0 0.0
  %1480 = vmatprep.subr.mxu0 0.0
  %1481 = vmatpush2.xpose.msra.mxu0 0.0
  %1482 = vmatprep.subr.mxu0 0.0
  %1483 = vmatpush2.xpose.msra.mxu0 0.0
  %1484 = vmatprep.subr.mxu0 0.0
  %1485 = vmatpush2.xpose.msra.mxu0 0.0
  %1486 = vmatprep.subr.mxu0 0.0
  %1487 = vmatpush2.xpose.msra.mxu0 0.0
  %1488 = vmatprep.subr.mxu0 0.0
  %1489 = vmatpush2.xpose.msra.mxu0 0.0
  %1490 = vmatprep.subr.mxu0 0.0
  %1491 = vmatpush2.xpose.msra.mxu0 0.0
  %1492 = vmatprep.subr.mxu0 0.0
  %1493 = vmatpush2.xpose.msra.mxu0 0.0
  %1494 = vmatprep.subr.mxu0 0.0
  %1495 = vmatpush2.xpose.msra.mxu0 0.0
  %1496 = vmatprep.subr.mxu0 0.0
  %1497 = vmatpush2.xpose.msra.mxu0 0.0
  %1498 = vmatprep.subr.mxu0 0.0
  %1499 = vmatpush2.xpose.msra.mxu0 0.0
  %1500 = vmatprep.mubr.f32.mxu0 0.0
  %1501 = vmatmul.mubr.f32.gmra.mxu0 %v1377
  %v1502 = vpop.f32.mrf.mxu0
  %v1503 = vadd.f32 %v1358, %v1502
  %v1504 = vpop.f32.mrf.mxu0
  %1505 = vmatprep.mubr.f32.mxu0 0.0
  %1506 = vmatmul.mubr.f32.gmra.mxu0 %v1380
  %v1507 = vpop.f32.mrf.mxu0
  %v1508 = vadd.f32 %v1363, %v1507
  %v1509 = vpop.f32.mrf.mxu0
  %1510 = vmatprep.mubr.f32.mxu0 0.0
  %1511 = vmatmul.mubr.f32.gmra.mxu0 %v1383
  %v1512 = vpop.f32.mrf.mxu0
  %v1513 = vadd.f32 %v1368, %v1512
  %v1514 = vpop.f32.mrf.mxu0
  %1515 = vmatprep.mubr.f32.mxu0 0.0
  %1516 = vmatmul.mubr.f32.gmra.mxu0 %v1386
  %v1517 = vpop.f32.mrf.mxu0
  %v1518 = vadd.f32 %v1373, %v1517
  %v1519 = vpop.f32.mrf.mxu0
  %1520 = vdwg.mxu0
  %1521 = vst [vmem:[%s7] sm:$0xff] %v1503
  %1522 = vst [vmem:[%s7 + $0x8] sm:$0xff] %v1508
  %1523 = vst [vmem:[%s7 + $0x10] sm:$0xff] %v1513
  %1524 = vst [vmem:[%s7 + $0x18] sm:$0xff] %v1518
  // Predicated region
  $region30: #{encoder1_forward.1} parent=0 // pred_check
    _
  $region31: #{encoder1_forward.1} parent=0 // pred_check_branch
    %1526 = sbr.rel (0) target = $region33
  $region32: #{encoder1_forward.1} parent=0 // pred_region
    _
  $region33: #{encoder1_forward.1} parent=0 // pred_fallthru
    _
  // Predicated region
  $region34: #{encoder1_forward.1} parent=0 // pred_check
    _
  $region35: #{encoder1_forward.1} parent=0 // pred_check_branch
    %1528 = sbr.rel (0) target = $region37
  $region36: #{encoder1_forward.1} parent=0 // pred_region
    _
  $region37: #{encoder1_forward.1} parent=0 // pred_fallthru
    _

</llo_original>
